<compile_context>
chip_gen: v6e
topology: v6e:2x2x1
jax: 0.10.0
libtpu: 0.0.40
codegen_flags: <defaults>
</compile_context>

<pallas_src>
import math
import functools

import jax
import jax.numpy as jnp
from jax import lax
from jax.experimental import pallas as pl
from jax.experimental.pallas import tpu as pltpu


# ----------------------------- config ---------------------------------------
class Config:
    vocab_size = 64
    block_size = 8          # max sequence length
    n_embd = 32             # == hidden_dim
    hidden_dim = 32
    n_head = 2
    head_size = 16          # hidden_dim // n_head
    n_layer = 2
    dropout = 0.0


# --------------------------- fused Pallas kernel -----------------------------
def _gpt_fused_kernel(idx_ref, tok_ref, pos_ref, vecs_ref, bias_ref,
                      wqkv_ref, wp_ref, w1_ref, w2_ref, lnf_ref, wlm_ref,
                      o_ref, *, n_layer, n_head, head_size):
    N = idx_ref.shape[0]              # B * S rows
    V, H = tok_ref.shape
    S = pos_ref.shape[0]
    B = N // S
    H3 = 3 * H

    # ---- embedding lookup: one-hot(ids) @ tok_emb on the MXU ----
    # NOTE: out-of-range token ids would produce an all-zero embedding row
    # (no bounds check), matching the previous behaviour; inputs are in-range.
    ids = idx_ref[...]                                         # (N, 1) int32
    vocab_iota = lax.broadcasted_iota(jnp.int32, (N, V), 1)
    onehot = (ids == vocab_iota).astype(jnp.float32)           # (N, V)
    x = jnp.dot(onehot, tok_ref[...], preferred_element_type=jnp.float32)
    # position embedding broadcast over batch: sublane concat, no wrapper tile
    x = x + jnp.concatenate([pos_ref[...]] * B, axis=0)        # (N, H)

    # ---- in-kernel block-diagonal causal additive mask (0 / -1e30) ----
    r = lax.broadcasted_iota(jnp.int32, (N, N), 0)
    c = lax.broadcasted_iota(jnp.int32, (N, N), 1)
    if (S & (S - 1)) == 0:            # power-of-two seq len: shift, not divide
        shift = S.bit_length() - 1
        rb = lax.shift_right_logical(r, shift)
        cb = lax.shift_right_logical(c, shift)
    else:
        rb, cb = r // S, c // S
    allowed = (rb == cb) & (r >= c)
    neg_mask = jnp.where(allowed, 0.0, -1e30).astype(jnp.float32)  # (N, N)

    inv_sqrt2 = jnp.float32(1.0 / math.sqrt(2.0))

    def layernorm(v, g, b, eps=1e-5):
        # PyTorch nn.LayerNorm: biased variance, eps inside sqrt.
        mu = jnp.mean(v, axis=-1, keepdims=True)
        var = jnp.mean((v - mu) ** 2, axis=-1, keepdims=True)
        return (v - mu) * lax.rsqrt(var + eps) * g + b

    for l in range(n_layer):                                   # unrolled at trace time
        vl = vecs_ref[l]                                       # (6, H)
        ln1g, ln1b = vl[0:1], vl[1:2]
        ln2g, ln2b = vl[2:3], vl[3:4]
        bp, b2 = vl[4:5], vl[5:6]
        bl = bias_ref[l]                                       # (2, 4H)
        bqkv = bl[0:1, :H3]                                    # (1, 3H), v-part pre-scaled
        b1 = bl[1:2, :]                                        # (1, 4H)

        # --- attention branch: x = x + MHA(LN1(x)) ---
        h1 = layernorm(x, ln1g, ln1b)
        # single fused QKV matmul: (N,H) @ (H,3H)
        qkv = jnp.dot(h1, wqkv_ref[l], preferred_element_type=jnp.float32) + bqkv
        wp = wp_ref[l]                                         # (H, H)

        att = None
        for h in range(n_head):                                # unrolled (n_head=2)
            lo, hi = h * head_size, (h + 1) * head_size
            qh = qkv[:, lo:hi]                                 # (N, hd)
            kh = qkv[:, H + lo:H + hi]                         # (N, hd)
            vh = qkv[:, 2 * H + lo:2 * H + hi]                 # (N, hd), already /sqrt(H)
            # trans_b-form contraction: no explicit transpose of kh
            s = lax.dot_general(qh, kh, (((1,), (1,)), ((), ())),
                                preferred_element_type=jnp.float32) + neg_mask
            m = jnp.max(s, axis=-1, keepdims=True)
            e = jnp.exp(s - m)
            p = e / jnp.sum(e, axis=-1, keepdims=True)         # exact softmax
            # reference's post-softmax /sqrt(hidden_dim) is folded into wv/bv
            oh = jnp.dot(p, vh, preferred_element_type=jnp.float32)        # (N, hd)
            # per-head slice of the projection -> accumulate (no lane concat)
            ph = jnp.dot(oh, wp[lo:hi, :], preferred_element_type=jnp.float32)
            att = ph if att is None else att + ph
        x = x + att + bp

        # --- feed-forward branch: x = x + FFN(LN2(x)) ---
        h2 = layernorm(x, ln2g, ln2b)
        f = jnp.dot(h2, w1_ref[l], preferred_element_type=jnp.float32) + b1
        f = 0.5 * f * (1.0 + lax.erf(f * inv_sqrt2))           # exact (erf) GELU
        f = jnp.dot(f, w2_ref[l], preferred_element_type=jnp.float32) + b2
        x = x + f

    # --- final LayerNorm + tied lm_head (lane-dense, V padded to 128) ---
    xn = layernorm(x, lnf_ref[0:1], lnf_ref[1:2])
    o_ref[...] = jnp.dot(xn, wlm_ref[...], preferred_element_type=jnp.float32)


# ------------------------------ wrapper ---------------------------------------
def gpt_forward(idx, packed, cfg):
    """Returns lane-padded logits of shape (B*S, Vp); slice [..., :V] downstream."""
    B, S = idx.shape
    N = B * S
    Vp = packed["wlm"].shape[1]

    idx_flat = idx.reshape(N, 1).astype(jnp.int32)
    pos = packed["pos_emb"][:S]                                # static (no-op when S==block_size)

    inputs = [idx_flat, packed["tok_emb"], pos,
              packed["vecs"], packed["biases"], packed["wqkv"],
              packed["wp"], packed["w1"], packed["w2"],
              packed["lnf"], packed["wlm"]]

    def full_spec(a):
        nd = a.ndim
        return pl.BlockSpec(a.shape, lambda i, _nd=nd: (0,) * _nd)

    kernel = functools.partial(_gpt_fused_kernel,
                               n_layer=cfg.n_layer,
                               n_head=cfg.n_head,
                               head_size=cfg.head_size)

    logits_pad = pl.pallas_call(
        kernel,
        out_shape=jax.ShapeDtypeStruct((N, Vp), jnp.float32),
        grid=(1,),
        in_specs=[full_spec(a) for a in inputs],
        out_specs=pl.BlockSpec((N, Vp), lambda i: (0, 0)),
        compiler_params=pltpu.CompilerParams(
            dimension_semantics=("arbitrary",)),
    )(*inputs)

    # TODO(synk): cross-entropy loss path (target is not None) not implemented; inference only.
    return logits_pad, None


# --------------------------- parameter init / packing -------------------------
def init_params(cfg, key):
    H, V, H4 = cfg.hidden_dim, cfg.vocab_size, cfg.hidden_dim * 4
    keys = iter(jax.random.split(key, 4 + cfg.n_layer * 8))

    def normal(k, shape):
        return (0.02 * jax.random.normal(k, shape)).astype(jnp.float32)

    params = {}
    params["tok_emb"] = normal(next(keys), (V, H))       # tied with lm_head weight
    params["pos_emb"] = normal(next(keys), (cfg.block_size, H))
    params["lnf_g"] = jnp.ones((1, H), jnp.float32)
    params["lnf_b"] = jnp.zeros((1, H), jnp.float32)

    blocks = []
    for _ in range(cfg.n_layer):
        blk = {
            "ln1g": jnp.ones((1, H), jnp.float32),
            "ln1b": jnp.zeros((1, H), jnp.float32),
            "wq": normal(next(keys), (H, H)), "bq": jnp.zeros((1, H), jnp.float32),
            "wk": normal(next(keys), (H, H)), "bk": jnp.zeros((1, H), jnp.float32),
            "wv": normal(next(keys), (H, H)), "bv": jnp.zeros((1, H), jnp.float32),
            "wp": normal(next(keys), (H, H)), "bp": jnp.zeros((1, H), jnp.float32),
            "ln2g": jnp.ones((1, H), jnp.float32),
            "ln2b": jnp.zeros((1, H), jnp.float32),
            "w1": normal(next(keys), (H, H4)), "b1": jnp.zeros((1, H4), jnp.float32),
            "w2": normal(next(keys), (H4, H)), "b2": jnp.zeros((1, H), jnp.float32),
        }
        blocks.append(blk)
    params["blocks"] = blocks
    return params


def pack_params(params, cfg):
    """Pack per-layer weights into a few stacked arrays for the fused kernel.

    The 1/sqrt(hidden_dim) post-softmax scale of the reference is folded into
    Wv/bv here (it commutes through p @ v @ Wp), so the kernel does no extra
    multiply per head.
    """
    V, H = cfg.vocab_size, cfg.hidden_dim
    H3, H4 = 3 * H, 4 * H
    inv_sqrt_h = 1.0 / math.sqrt(H)

    vecs, biases, wqkv, wps, w1s, w2s = [], [], [], [], [], []
    for blk in params["blocks"]:
        vecs.append(jnp.concatenate(
            [blk["ln1g"], blk["ln1b"], blk["ln2g"], blk["ln2b"],
             blk["bp"], blk["b2"]], axis=0))                                   # (6, H)
        bqkv = jnp.concatenate(
            [blk["bq"], blk["bk"], blk["bv"] * inv_sqrt_h], axis=1)            # (1, 3H)
        bqkv = jnp.pad(bqkv, ((0, 0), (0, H4 - H3)))                           # pad to 4H
        biases.append(jnp.concatenate([bqkv, blk["b1"]], axis=0))              # (2, 4H)
        wqkv.append(jnp.concatenate(
            [blk["wq"], blk["wk"], blk["wv"] * inv_sqrt_h], axis=1))           # (H, 3H)
        wps.append(blk["wp"])
        w1s.append(blk["w1"])
        w2s.append(blk["w2"])

    Vp = ((V + 127) // 128) * 128          # lane-dense padded vocab for the output
    wlm = params["tok_emb"].T              # tied lm_head weight: (H, V)
    wlm_pad = jnp.pad(wlm, ((0, 0), (0, Vp - V)))

    return {
        "tok_emb": params["tok_emb"],      # (V, H)
        "pos_emb": params["pos_emb"],      # (block_size, H)
        "vecs": jnp.stack(vecs, 0),        # (L, 6, H)
        "biases": jnp.stack(biases, 0),    # (L, 2, 4H)  row0=[bq|bk|bv/sqrtH|0], row1=b1
        "wqkv": jnp.stack(wqkv, 0),        # (L, H, 3H)
        "wp": jnp.stack(wps, 0),           # (L, H, H)
        "w1": jnp.stack(w1s, 0),           # (L, H, 4H)
        "w2": jnp.stack(w2s, 0),           # (L, 4H, H)
        "lnf": jnp.concatenate([params["lnf_g"], params["lnf_b"]], 0),  # (2, H)
        "wlm": wlm_pad,                    # (H, Vp)
    }


# ------------------------------- main -----------------------------------------
if __name__ == "__main__":
    cfg = Config()
    key = jax.random.PRNGKey(0)
    pkey, ikey = jax.random.split(key)

    params = init_params(cfg, pkey)
    packed = pack_params(params, cfg)

    B, S, V = 2, cfg.block_size, cfg.vocab_size
    idx = jax.random.randint(ikey, (B, S), 0, V, dtype=jnp.int32)

    fwd = jax.jit(lambda i, p: gpt_forward(i, p, cfg)[0])
    logits_pad = jax.block_until_ready(fwd(idx, packed))       # (B*S, Vp)

    # one-time un-pad / reshape outside the jitted hot path
    Vp = packed["wlm"].shape[1]
    logits = logits_pad.reshape(B, S, Vp)[..., :V]

    assert logits.shape == (B, S, V)
    assert bool(jnp.all(jnp.isfinite(logits)))
    print("KERNEL_OK")
</pallas_src>

<mosaic_0001>
module attributes {stable_mosaic.version = 11 : i64} {
  func.func @_gpt_fused_kernel(%arg0: i32, %arg1: memref<16x1xi32, #tpu.memory_space<vmem>>, %arg2: memref<64x32xf32, #tpu.memory_space<vmem>>, %arg3: memref<8x32xf32, #tpu.memory_space<vmem>>, %arg4: memref<2x6x32xf32, #tpu.memory_space<vmem>>, %arg5: memref<2x2x128xf32, #tpu.memory_space<vmem>>, %arg6: memref<2x32x96xf32, #tpu.memory_space<vmem>>, %arg7: memref<2x32x32xf32, #tpu.memory_space<vmem>>, %arg8: memref<2x32x128xf32, #tpu.memory_space<vmem>>, %arg9: memref<2x128x32xf32, #tpu.memory_space<vmem>>, %arg10: memref<2x32xf32, #tpu.memory_space<vmem>>, %arg11: memref<32x128xf32, #tpu.memory_space<vmem>>, %arg12: memref<16x128xf32, #tpu.memory_space<vmem>>) attributes {dimension_semantics = [#tpu.dimension_semantics<arbitrary>], iteration_bounds = array<i64: 1>, scalar_prefetch = 0 : i64, scratch_operands = 0 : i64, tpu.core_type = #tpu.core_type<tc>, window_params = [{pipeline_mode = #tpu.pipeline_mode<synchronous>, transform_indices = @transform_0, window_bounds = array<i64: 16, 1>}, {pipeline_mode = #tpu.pipeline_mode<synchronous>, transform_indices = @transform_1, window_bounds = array<i64: 64, 32>}, {pipeline_mode = #tpu.pipeline_mode<synchronous>, transform_indices = @transform_2, window_bounds = array<i64: 8, 32>}, {pipeline_mode = #tpu.pipeline_mode<synchronous>, transform_indices = @transform_3, window_bounds = array<i64: 2, 6, 32>}, {pipeline_mode = #tpu.pipeline_mode<synchronous>, transform_indices = @transform_4, window_bounds = array<i64: 2, 2, 128>}, {pipeline_mode = #tpu.pipeline_mode<synchronous>, transform_indices = @transform_5, window_bounds = array<i64: 2, 32, 96>}, {pipeline_mode = #tpu.pipeline_mode<synchronous>, transform_indices = @transform_6, window_bounds = array<i64: 2, 32, 32>}, {pipeline_mode = #tpu.pipeline_mode<synchronous>, transform_indices = @transform_7, window_bounds = array<i64: 2, 32, 128>}, {pipeline_mode = #tpu.pipeline_mode<synchronous>, transform_indices = @transform_8, window_bounds = array<i64: 2, 128, 32>}, {pipeline_mode = #tpu.pipeline_mode<synchronous>, transform_indices = @transform_9, window_bounds = array<i64: 2, 32>}, {pipeline_mode = #tpu.pipeline_mode<synchronous>, transform_indices = @transform_10, window_bounds = array<i64: 32, 128>}, {pipeline_mode = #tpu.pipeline_mode<synchronous>, transform_indices = @transform_11, window_bounds = array<i64: 16, 128>}]} {
    %c0 = arith.constant 0 : index
    %c0_0 = arith.constant 0 : index
    %0 = vector.load %arg1[%c0, %c0_0] : memref<16x1xi32, #tpu.memory_space<vmem>>, vector<16x1xi32>
    %1 = tpu.iota {dimensions = array<i32: 1>} : vector<16x64xi32>
    %2 = vector.broadcast %0 : vector<16x1xi32> to vector<16x64xi32>
    %3 = arith.cmpi eq, %2, %1 : vector<16x64xi32>
    %4 = arith.extui %3 : vector<16x64xi1> to vector<16x64xi32>
    %5 = arith.sitofp %4 : vector<16x64xi32> to vector<16x64xf32>
    %c0_1 = arith.constant 0 : index
    %c0_2 = arith.constant 0 : index
    %6 = vector.load %arg2[%c0_1, %c0_2] : memref<64x32xf32, #tpu.memory_space<vmem>>, vector<64x32xf32>
    %cst = arith.constant dense<0.000000e+00> : vector<16x32xf32>
    %7 = tpu.matmul %5, %6, %cst {dimension_numbers = #tpu.dot_dimension_numbers<[1], [0], [0], [1], [0, 0, 1, 1], [], []>} : vector<16x64xf32>, vector<64x32xf32>, vector<16x32xf32> -> vector<16x32xf32>
    %c0_3 = arith.constant 0 : index
    %c0_4 = arith.constant 0 : index
    %8 = vector.load %arg3[%c0_3, %c0_4] : memref<8x32xf32, #tpu.memory_space<vmem>>, vector<8x32xf32>
    %9 = tpu.concatenate %8, %8 in 0 : vector<8x32xf32>, vector<8x32xf32> -> vector<16x32xf32>
    %10 = arith.addf %7, %9 : vector<16x32xf32>
    %11 = tpu.iota {dimensions = array<i32: 0>} : vector<16x16xi32>
    %12 = tpu.iota {dimensions = array<i32: 1>} : vector<16x16xi32>
    %c3_i32 = arith.constant 3 : i32
    %13 = vector.broadcast %c3_i32 : i32 to vector<16x16xi32>
    %14 = arith.shrui %11, %13 : vector<16x16xi32>
    %c3_i32_5 = arith.constant 3 : i32
    %15 = vector.broadcast %c3_i32_5 : i32 to vector<16x16xi32>
    %16 = arith.shrui %12, %15 : vector<16x16xi32>
    %17 = arith.cmpi eq, %14, %16 : vector<16x16xi32>
    %18 = arith.cmpi sge, %11, %12 : vector<16x16xi32>
    %19 = arith.andi %17, %18 : vector<16x16xi1>
    %cst_6 = arith.constant 0.000000e+00 : f32
    %cst_7 = arith.constant -1.000000e+30 : f32
    %20 = vector.broadcast %cst_6 : f32 to vector<16x16xf32>
    %21 = vector.broadcast %cst_7 : f32 to vector<16x16xf32>
    %22 = arith.select %19, %20, %21 : vector<16x16xi1>, vector<16x16xf32>
    %c0_8 = arith.constant 0 : index
    %c0_9 = arith.constant 0 : index
    %c0_10 = arith.constant 0 : index
    %23 = vector.load %arg4[%c0_8, %c0_9, %c0_10] : memref<2x6x32xf32, #tpu.memory_space<vmem>>, vector<1x6x32xf32>
    %24 = vector.shape_cast %23 : vector<1x6x32xf32> to vector<6x32xf32>
    %25 = vector.extract_strided_slice %24 {offsets = [0, 0], sizes = [1, 32], strides = [1, 1]} : vector<6x32xf32> to vector<1x32xf32>
    %26 = vector.extract_strided_slice %24 {offsets = [1, 0], sizes = [1, 32], strides = [1, 1]} : vector<6x32xf32> to vector<1x32xf32>
    %27 = vector.extract_strided_slice %24 {offsets = [2, 0], sizes = [1, 32], strides = [1, 1]} : vector<6x32xf32> to vector<1x32xf32>
    %28 = vector.extract_strided_slice %24 {offsets = [3, 0], sizes = [1, 32], strides = [1, 1]} : vector<6x32xf32> to vector<1x32xf32>
    %29 = vector.extract_strided_slice %24 {offsets = [4, 0], sizes = [1, 32], strides = [1, 1]} : vector<6x32xf32> to vector<1x32xf32>
    %30 = vector.extract_strided_slice %24 {offsets = [5, 0], sizes = [1, 32], strides = [1, 1]} : vector<6x32xf32> to vector<1x32xf32>
    %c0_11 = arith.constant 0 : index
    %c0_12 = arith.constant 0 : index
    %c0_13 = arith.constant 0 : index
    %31 = vector.load %arg5[%c0_11, %c0_12, %c0_13] : memref<2x2x128xf32, #tpu.memory_space<vmem>>, vector<1x2x128xf32>
    %32 = vector.shape_cast %31 : vector<1x2x128xf32> to vector<2x128xf32>
    %33 = vector.extract_strided_slice %32 {offsets = [0, 0], sizes = [1, 96], strides = [1, 1]} : vector<2x128xf32> to vector<1x96xf32>
    %34 = vector.extract_strided_slice %32 {offsets = [1, 0], sizes = [1, 128], strides = [1, 1]} : vector<2x128xf32> to vector<1x128xf32>
    %cst_14 = arith.constant dense<0.000000e+00> : vector<16xf32>
    %35 = vector.multi_reduction <add>, %10, %cst_14 [1] : vector<16x32xf32> to vector<16xf32>
    %36 = vector.shape_cast %35 : vector<16xf32> to vector<16x1xf32>
    %cst_15 = arith.constant 3.200000e+01 : f32
    %37 = vector.broadcast %cst_15 : f32 to vector<16x1xf32>
    %38 = arith.divf %36, %37 : vector<16x1xf32>
    %39 = vector.broadcast %38 : vector<16x1xf32> to vector<16x32xf32>
    %40 = arith.subf %10, %39 : vector<16x32xf32>
    %41 = arith.mulf %40, %40 : vector<16x32xf32>
    %cst_16 = arith.constant dense<0.000000e+00> : vector<16xf32>
    %42 = vector.multi_reduction <add>, %41, %cst_16 [1] : vector<16x32xf32> to vector<16xf32>
    %43 = vector.shape_cast %42 : vector<16xf32> to vector<16x1xf32>
    %cst_17 = arith.constant 3.200000e+01 : f32
    %44 = vector.broadcast %cst_17 : f32 to vector<16x1xf32>
    %45 = arith.divf %43, %44 : vector<16x1xf32>
    %46 = vector.broadcast %38 : vector<16x1xf32> to vector<16x32xf32>
    %47 = arith.subf %10, %46 : vector<16x32xf32>
    %cst_18 = arith.constant 9.99999974E-6 : f32
    %48 = vector.broadcast %cst_18 : f32 to vector<16x1xf32>
    %49 = arith.addf %45, %48 : vector<16x1xf32>
    %50 = math.rsqrt %49 : vector<16x1xf32>
    %51 = vector.broadcast %50 : vector<16x1xf32> to vector<16x32xf32>
    %52 = arith.mulf %47, %51 : vector<16x32xf32>
    %53 = vector.broadcast %25 : vector<1x32xf32> to vector<16x32xf32>
    %54 = arith.mulf %52, %53 : vector<16x32xf32>
    %55 = vector.broadcast %26 : vector<1x32xf32> to vector<16x32xf32>
    %56 = arith.addf %54, %55 : vector<16x32xf32>
    %c0_19 = arith.constant 0 : index
    %c0_20 = arith.constant 0 : index
    %c0_21 = arith.constant 0 : index
    %57 = vector.load %arg6[%c0_19, %c0_20, %c0_21] : memref<2x32x96xf32, #tpu.memory_space<vmem>>, vector<1x32x96xf32>
    %58 = vector.shape_cast %57 : vector<1x32x96xf32> to vector<32x96xf32>
    %cst_22 = arith.constant dense<0.000000e+00> : vector<16x96xf32>
    %59 = tpu.matmul %56, %58, %cst_22 {dimension_numbers = #tpu.dot_dimension_numbers<[1], [0], [0], [1], [0, 0, 1, 1], [], []>} : vector<16x32xf32>, vector<32x96xf32>, vector<16x96xf32> -> vector<16x96xf32>
    %60 = vector.broadcast %33 : vector<1x96xf32> to vector<16x96xf32>
    %61 = arith.addf %59, %60 : vector<16x96xf32>
    %c0_23 = arith.constant 0 : index
    %c0_24 = arith.constant 0 : index
    %c0_25 = arith.constant 0 : index
    %62 = vector.load %arg7[%c0_23, %c0_24, %c0_25] : memref<2x32x32xf32, #tpu.memory_space<vmem>>, vector<1x32x32xf32>
    %63 = vector.shape_cast %62 : vector<1x32x32xf32> to vector<32x32xf32>
    %64 = vector.extract_strided_slice %61 {offsets = [0, 0], sizes = [16, 16], strides = [1, 1]} : vector<16x96xf32> to vector<16x16xf32>
    %65 = vector.extract_strided_slice %61 {offsets = [0, 32], sizes = [16, 16], strides = [1, 1]} : vector<16x96xf32> to vector<16x16xf32>
    %66 = vector.extract_strided_slice %61 {offsets = [0, 64], sizes = [16, 16], strides = [1, 1]} : vector<16x96xf32> to vector<16x16xf32>
    %cst_26 = arith.constant dense<0.000000e+00> : vector<16x16xf32>
    %67 = tpu.matmul %64, %65, %cst_26 {dimension_numbers = #tpu.dot_dimension_numbers<[1], [1], [0], [0], [0, 0, 1, 0], [], []>} : vector<16x16xf32>, vector<16x16xf32>, vector<16x16xf32> -> vector<16x16xf32>
    %68 = arith.addf %67, %22 : vector<16x16xf32>
    %cst_27 = arith.constant dense<0xFF800000> : vector<16xf32>
    %69 = vector.multi_reduction <maximumf>, %68, %cst_27 [1] : vector<16x16xf32> to vector<16xf32>
    %70 = vector.shape_cast %69 : vector<16xf32> to vector<16x1xf32>
    %71 = vector.broadcast %70 : vector<16x1xf32> to vector<16x16xf32>
    %72 = arith.subf %68, %71 : vector<16x16xf32>
    %73 = math.exp %72 : vector<16x16xf32>
    %cst_28 = arith.constant dense<0.000000e+00> : vector<16xf32>
    %74 = vector.multi_reduction <add>, %73, %cst_28 [1] : vector<16x16xf32> to vector<16xf32>
    %75 = vector.shape_cast %74 : vector<16xf32> to vector<16x1xf32>
    %76 = vector.broadcast %75 : vector<16x1xf32> to vector<16x16xf32>
    %77 = arith.divf %73, %76 : vector<16x16xf32>
    %cst_29 = arith.constant dense<0.000000e+00> : vector<16x16xf32>
    %78 = tpu.matmul %77, %66, %cst_29 {dimension_numbers = #tpu.dot_dimension_numbers<[1], [0], [0], [1], [0, 0, 1, 1], [], []>} : vector<16x16xf32>, vector<16x16xf32>, vector<16x16xf32> -> vector<16x16xf32>
    %79 = vector.extract_strided_slice %63 {offsets = [0, 0], sizes = [16, 32], strides = [1, 1]} : vector<32x32xf32> to vector<16x32xf32>
    %cst_30 = arith.constant dense<0.000000e+00> : vector<16x32xf32>
    %80 = tpu.matmul %78, %79, %cst_30 {dimension_numbers = #tpu.dot_dimension_numbers<[1], [0], [0], [1], [0, 0, 1, 1], [], []>} : vector<16x16xf32>, vector<16x32xf32>, vector<16x32xf32> -> vector<16x32xf32>
    %81 = vector.extract_strided_slice %61 {offsets = [0, 16], sizes = [16, 16], strides = [1, 1]} : vector<16x96xf32> to vector<16x16xf32>
    %82 = vector.extract_strided_slice %61 {offsets = [0, 48], sizes = [16, 16], strides = [1, 1]} : vector<16x96xf32> to vector<16x16xf32>
    %83 = vector.extract_strided_slice %61 {offsets = [0, 80], sizes = [16, 16], strides = [1, 1]} : vector<16x96xf32> to vector<16x16xf32>
    %cst_31 = arith.constant dense<0.000000e+00> : vector<16x16xf32>
    %84 = tpu.matmul %81, %82, %cst_31 {dimension_numbers = #tpu.dot_dimension_numbers<[1], [1], [0], [0], [0, 0, 1, 0], [], []>} : vector<16x16xf32>, vector<16x16xf32>, vector<16x16xf32> -> vector<16x16xf32>
    %85 = arith.addf %84, %22 : vector<16x16xf32>
    %cst_32 = arith.constant dense<0xFF800000> : vector<16xf32>
    %86 = vector.multi_reduction <maximumf>, %85, %cst_32 [1] : vector<16x16xf32> to vector<16xf32>
    %87 = vector.shape_cast %86 : vector<16xf32> to vector<16x1xf32>
    %88 = vector.broadcast %87 : vector<16x1xf32> to vector<16x16xf32>
    %89 = arith.subf %85, %88 : vector<16x16xf32>
    %90 = math.exp %89 : vector<16x16xf32>
    %cst_33 = arith.constant dense<0.000000e+00> : vector<16xf32>
    %91 = vector.multi_reduction <add>, %90, %cst_33 [1] : vector<16x16xf32> to vector<16xf32>
    %92 = vector.shape_cast %91 : vector<16xf32> to vector<16x1xf32>
    %93 = vector.broadcast %92 : vector<16x1xf32> to vector<16x16xf32>
    %94 = arith.divf %90, %93 : vector<16x16xf32>
    %cst_34 = arith.constant dense<0.000000e+00> : vector<16x16xf32>
    %95 = tpu.matmul %94, %83, %cst_34 {dimension_numbers = #tpu.dot_dimension_numbers<[1], [0], [0], [1], [0, 0, 1, 1], [], []>} : vector<16x16xf32>, vector<16x16xf32>, vector<16x16xf32> -> vector<16x16xf32>
    %96 = vector.extract_strided_slice %63 {offsets = [16, 0], sizes = [16, 32], strides = [1, 1]} : vector<32x32xf32> to vector<16x32xf32>
    %cst_35 = arith.constant dense<0.000000e+00> : vector<16x32xf32>
    %97 = tpu.matmul %95, %96, %cst_35 {dimension_numbers = #tpu.dot_dimension_numbers<[1], [0], [0], [1], [0, 0, 1, 1], [], []>} : vector<16x16xf32>, vector<16x32xf32>, vector<16x32xf32> -> vector<16x32xf32>
    %98 = arith.addf %80, %97 : vector<16x32xf32>
    %99 = arith.addf %10, %98 : vector<16x32xf32>
    %100 = vector.broadcast %29 : vector<1x32xf32> to vector<16x32xf32>
    %101 = arith.addf %99, %100 : vector<16x32xf32>
    %cst_36 = arith.constant dense<0.000000e+00> : vector<16xf32>
    %102 = vector.multi_reduction <add>, %101, %cst_36 [1] : vector<16x32xf32> to vector<16xf32>
    %103 = vector.shape_cast %102 : vector<16xf32> to vector<16x1xf32>
    %cst_37 = arith.constant 3.200000e+01 : f32
    %104 = vector.broadcast %cst_37 : f32 to vector<16x1xf32>
    %105 = arith.divf %103, %104 : vector<16x1xf32>
    %106 = vector.broadcast %105 : vector<16x1xf32> to vector<16x32xf32>
    %107 = arith.subf %101, %106 : vector<16x32xf32>
    %108 = arith.mulf %107, %107 : vector<16x32xf32>
    %cst_38 = arith.constant dense<0.000000e+00> : vector<16xf32>
    %109 = vector.multi_reduction <add>, %108, %cst_38 [1] : vector<16x32xf32> to vector<16xf32>
    %110 = vector.shape_cast %109 : vector<16xf32> to vector<16x1xf32>
    %cst_39 = arith.constant 3.200000e+01 : f32
    %111 = vector.broadcast %cst_39 : f32 to vector<16x1xf32>
    %112 = arith.divf %110, %111 : vector<16x1xf32>
    %113 = vector.broadcast %105 : vector<16x1xf32> to vector<16x32xf32>
    %114 = arith.subf %101, %113 : vector<16x32xf32>
    %cst_40 = arith.constant 9.99999974E-6 : f32
    %115 = vector.broadcast %cst_40 : f32 to vector<16x1xf32>
    %116 = arith.addf %112, %115 : vector<16x1xf32>
    %117 = math.rsqrt %116 : vector<16x1xf32>
    %118 = vector.broadcast %117 : vector<16x1xf32> to vector<16x32xf32>
    %119 = arith.mulf %114, %118 : vector<16x32xf32>
    %120 = vector.broadcast %27 : vector<1x32xf32> to vector<16x32xf32>
    %121 = arith.mulf %119, %120 : vector<16x32xf32>
    %122 = vector.broadcast %28 : vector<1x32xf32> to vector<16x32xf32>
    %123 = arith.addf %121, %122 : vector<16x32xf32>
    %c0_41 = arith.constant 0 : index
    %c0_42 = arith.constant 0 : index
    %c0_43 = arith.constant 0 : index
    %124 = vector.load %arg8[%c0_41, %c0_42, %c0_43] : memref<2x32x128xf32, #tpu.memory_space<vmem>>, vector<1x32x128xf32>
    %125 = vector.shape_cast %124 : vector<1x32x128xf32> to vector<32x128xf32>
    %cst_44 = arith.constant dense<0.000000e+00> : vector<16x128xf32>
    %126 = tpu.matmul %123, %125, %cst_44 {dimension_numbers = #tpu.dot_dimension_numbers<[1], [0], [0], [1], [0, 0, 1, 1], [], []>} : vector<16x32xf32>, vector<32x128xf32>, vector<16x128xf32> -> vector<16x128xf32>
    %127 = vector.broadcast %34 : vector<1x128xf32> to vector<16x128xf32>
    %128 = arith.addf %126, %127 : vector<16x128xf32>
    %cst_45 = arith.constant 5.000000e-01 : f32
    %129 = vector.broadcast %cst_45 : f32 to vector<16x128xf32>
    %130 = arith.mulf %129, %128 : vector<16x128xf32>
    %cst_46 = arith.constant 0.707106769 : f32
    %131 = vector.broadcast %cst_46 : f32 to vector<16x128xf32>
    %132 = arith.mulf %128, %131 : vector<16x128xf32>
    %133 = math.erf %132 : vector<16x128xf32>
    %cst_47 = arith.constant 1.000000e+00 : f32
    %134 = vector.broadcast %cst_47 : f32 to vector<16x128xf32>
    %135 = arith.addf %134, %133 : vector<16x128xf32>
    %136 = arith.mulf %130, %135 : vector<16x128xf32>
    %c0_48 = arith.constant 0 : index
    %c0_49 = arith.constant 0 : index
    %c0_50 = arith.constant 0 : index
    %137 = vector.load %arg9[%c0_48, %c0_49, %c0_50] : memref<2x128x32xf32, #tpu.memory_space<vmem>>, vector<1x128x32xf32>
    %138 = vector.shape_cast %137 : vector<1x128x32xf32> to vector<128x32xf32>
    %cst_51 = arith.constant dense<0.000000e+00> : vector<16x32xf32>
    %139 = tpu.matmul %136, %138, %cst_51 {dimension_numbers = #tpu.dot_dimension_numbers<[1], [0], [0], [1], [0, 0, 1, 1], [], []>} : vector<16x128xf32>, vector<128x32xf32>, vector<16x32xf32> -> vector<16x32xf32>
    %140 = vector.broadcast %30 : vector<1x32xf32> to vector<16x32xf32>
    %141 = arith.addf %139, %140 : vector<16x32xf32>
    %142 = arith.addf %101, %141 : vector<16x32xf32>
    %c1 = arith.constant 1 : index
    %c0_52 = arith.constant 0 : index
    %c0_53 = arith.constant 0 : index
    %143 = vector.load %arg4[%c1, %c0_52, %c0_53] : memref<2x6x32xf32, #tpu.memory_space<vmem>>, vector<1x6x32xf32>
    %144 = vector.shape_cast %143 : vector<1x6x32xf32> to vector<6x32xf32>
    %145 = vector.extract_strided_slice %144 {offsets = [0, 0], sizes = [1, 32], strides = [1, 1]} : vector<6x32xf32> to vector<1x32xf32>
    %146 = vector.extract_strided_slice %144 {offsets = [1, 0], sizes = [1, 32], strides = [1, 1]} : vector<6x32xf32> to vector<1x32xf32>
    %147 = vector.extract_strided_slice %144 {offsets = [2, 0], sizes = [1, 32], strides = [1, 1]} : vector<6x32xf32> to vector<1x32xf32>
    %148 = vector.extract_strided_slice %144 {offsets = [3, 0], sizes = [1, 32], strides = [1, 1]} : vector<6x32xf32> to vector<1x32xf32>
    %149 = vector.extract_strided_slice %144 {offsets = [4, 0], sizes = [1, 32], strides = [1, 1]} : vector<6x32xf32> to vector<1x32xf32>
    %150 = vector.extract_strided_slice %144 {offsets = [5, 0], sizes = [1, 32], strides = [1, 1]} : vector<6x32xf32> to vector<1x32xf32>
    %c1_54 = arith.constant 1 : index
    %c0_55 = arith.constant 0 : index
    %c0_56 = arith.constant 0 : index
    %151 = vector.load %arg5[%c1_54, %c0_55, %c0_56] : memref<2x2x128xf32, #tpu.memory_space<vmem>>, vector<1x2x128xf32>
    %152 = vector.shape_cast %151 : vector<1x2x128xf32> to vector<2x128xf32>
    %153 = vector.extract_strided_slice %152 {offsets = [0, 0], sizes = [1, 96], strides = [1, 1]} : vector<2x128xf32> to vector<1x96xf32>
    %154 = vector.extract_strided_slice %152 {offsets = [1, 0], sizes = [1, 128], strides = [1, 1]} : vector<2x128xf32> to vector<1x128xf32>
    %cst_57 = arith.constant dense<0.000000e+00> : vector<16xf32>
    %155 = vector.multi_reduction <add>, %142, %cst_57 [1] : vector<16x32xf32> to vector<16xf32>
    %156 = vector.shape_cast %155 : vector<16xf32> to vector<16x1xf32>
    %cst_58 = arith.constant 3.200000e+01 : f32
    %157 = vector.broadcast %cst_58 : f32 to vector<16x1xf32>
    %158 = arith.divf %156, %157 : vector<16x1xf32>
    %159 = vector.broadcast %158 : vector<16x1xf32> to vector<16x32xf32>
    %160 = arith.subf %142, %159 : vector<16x32xf32>
    %161 = arith.mulf %160, %160 : vector<16x32xf32>
    %cst_59 = arith.constant dense<0.000000e+00> : vector<16xf32>
    %162 = vector.multi_reduction <add>, %161, %cst_59 [1] : vector<16x32xf32> to vector<16xf32>
    %163 = vector.shape_cast %162 : vector<16xf32> to vector<16x1xf32>
    %cst_60 = arith.constant 3.200000e+01 : f32
    %164 = vector.broadcast %cst_60 : f32 to vector<16x1xf32>
    %165 = arith.divf %163, %164 : vector<16x1xf32>
    %166 = vector.broadcast %158 : vector<16x1xf32> to vector<16x32xf32>
    %167 = arith.subf %142, %166 : vector<16x32xf32>
    %cst_61 = arith.constant 9.99999974E-6 : f32
    %168 = vector.broadcast %cst_61 : f32 to vector<16x1xf32>
    %169 = arith.addf %165, %168 : vector<16x1xf32>
    %170 = math.rsqrt %169 : vector<16x1xf32>
    %171 = vector.broadcast %170 : vector<16x1xf32> to vector<16x32xf32>
    %172 = arith.mulf %167, %171 : vector<16x32xf32>
    %173 = vector.broadcast %145 : vector<1x32xf32> to vector<16x32xf32>
    %174 = arith.mulf %172, %173 : vector<16x32xf32>
    %175 = vector.broadcast %146 : vector<1x32xf32> to vector<16x32xf32>
    %176 = arith.addf %174, %175 : vector<16x32xf32>
    %c1_62 = arith.constant 1 : index
    %c0_63 = arith.constant 0 : index
    %c0_64 = arith.constant 0 : index
    %177 = vector.load %arg6[%c1_62, %c0_63, %c0_64] : memref<2x32x96xf32, #tpu.memory_space<vmem>>, vector<1x32x96xf32>
    %178 = vector.shape_cast %177 : vector<1x32x96xf32> to vector<32x96xf32>
    %cst_65 = arith.constant dense<0.000000e+00> : vector<16x96xf32>
    %179 = tpu.matmul %176, %178, %cst_65 {dimension_numbers = #tpu.dot_dimension_numbers<[1], [0], [0], [1], [0, 0, 1, 1], [], []>} : vector<16x32xf32>, vector<32x96xf32>, vector<16x96xf32> -> vector<16x96xf32>
    %180 = vector.broadcast %153 : vector<1x96xf32> to vector<16x96xf32>
    %181 = arith.addf %179, %180 : vector<16x96xf32>
    %c1_66 = arith.constant 1 : index
    %c0_67 = arith.constant 0 : index
    %c0_68 = arith.constant 0 : index
    %182 = vector.load %arg7[%c1_66, %c0_67, %c0_68] : memref<2x32x32xf32, #tpu.memory_space<vmem>>, vector<1x32x32xf32>
    %183 = vector.shape_cast %182 : vector<1x32x32xf32> to vector<32x32xf32>
    %184 = vector.extract_strided_slice %181 {offsets = [0, 0], sizes = [16, 16], strides = [1, 1]} : vector<16x96xf32> to vector<16x16xf32>
    %185 = vector.extract_strided_slice %181 {offsets = [0, 32], sizes = [16, 16], strides = [1, 1]} : vector<16x96xf32> to vector<16x16xf32>
    %186 = vector.extract_strided_slice %181 {offsets = [0, 64], sizes = [16, 16], strides = [1, 1]} : vector<16x96xf32> to vector<16x16xf32>
    %cst_69 = arith.constant dense<0.000000e+00> : vector<16x16xf32>
    %187 = tpu.matmul %184, %185, %cst_69 {dimension_numbers = #tpu.dot_dimension_numbers<[1], [1], [0], [0], [0, 0, 1, 0], [], []>} : vector<16x16xf32>, vector<16x16xf32>, vector<16x16xf32> -> vector<16x16xf32>
    %188 = arith.addf %187, %22 : vector<16x16xf32>
    %cst_70 = arith.constant dense<0xFF800000> : vector<16xf32>
    %189 = vector.multi_reduction <maximumf>, %188, %cst_70 [1] : vector<16x16xf32> to vector<16xf32>
    %190 = vector.shape_cast %189 : vector<16xf32> to vector<16x1xf32>
    %191 = vector.broadcast %190 : vector<16x1xf32> to vector<16x16xf32>
    %192 = arith.subf %188, %191 : vector<16x16xf32>
    %193 = math.exp %192 : vector<16x16xf32>
    %cst_71 = arith.constant dense<0.000000e+00> : vector<16xf32>
    %194 = vector.multi_reduction <add>, %193, %cst_71 [1] : vector<16x16xf32> to vector<16xf32>
    %195 = vector.shape_cast %194 : vector<16xf32> to vector<16x1xf32>
    %196 = vector.broadcast %195 : vector<16x1xf32> to vector<16x16xf32>
    %197 = arith.divf %193, %196 : vector<16x16xf32>
    %cst_72 = arith.constant dense<0.000000e+00> : vector<16x16xf32>
    %198 = tpu.matmul %197, %186, %cst_72 {dimension_numbers = #tpu.dot_dimension_numbers<[1], [0], [0], [1], [0, 0, 1, 1], [], []>} : vector<16x16xf32>, vector<16x16xf32>, vector<16x16xf32> -> vector<16x16xf32>
    %199 = vector.extract_strided_slice %183 {offsets = [0, 0], sizes = [16, 32], strides = [1, 1]} : vector<32x32xf32> to vector<16x32xf32>
    %cst_73 = arith.constant dense<0.000000e+00> : vector<16x32xf32>
    %200 = tpu.matmul %198, %199, %cst_73 {dimension_numbers = #tpu.dot_dimension_numbers<[1], [0], [0], [1], [0, 0, 1, 1], [], []>} : vector<16x16xf32>, vector<16x32xf32>, vector<16x32xf32> -> vector<16x32xf32>
    %201 = vector.extract_strided_slice %181 {offsets = [0, 16], sizes = [16, 16], strides = [1, 1]} : vector<16x96xf32> to vector<16x16xf32>
    %202 = vector.extract_strided_slice %181 {offsets = [0, 48], sizes = [16, 16], strides = [1, 1]} : vector<16x96xf32> to vector<16x16xf32>
    %203 = vector.extract_strided_slice %181 {offsets = [0, 80], sizes = [16, 16], strides = [1, 1]} : vector<16x96xf32> to vector<16x16xf32>
    %cst_74 = arith.constant dense<0.000000e+00> : vector<16x16xf32>
    %204 = tpu.matmul %201, %202, %cst_74 {dimension_numbers = #tpu.dot_dimension_numbers<[1], [1], [0], [0], [0, 0, 1, 0], [], []>} : vector<16x16xf32>, vector<16x16xf32>, vector<16x16xf32> -> vector<16x16xf32>
    %205 = arith.addf %204, %22 : vector<16x16xf32>
    %cst_75 = arith.constant dense<0xFF800000> : vector<16xf32>
    %206 = vector.multi_reduction <maximumf>, %205, %cst_75 [1] : vector<16x16xf32> to vector<16xf32>
    %207 = vector.shape_cast %206 : vector<16xf32> to vector<16x1xf32>
    %208 = vector.broadcast %207 : vector<16x1xf32> to vector<16x16xf32>
    %209 = arith.subf %205, %208 : vector<16x16xf32>
    %210 = math.exp %209 : vector<16x16xf32>
    %cst_76 = arith.constant dense<0.000000e+00> : vector<16xf32>
    %211 = vector.multi_reduction <add>, %210, %cst_76 [1] : vector<16x16xf32> to vector<16xf32>
    %212 = vector.shape_cast %211 : vector<16xf32> to vector<16x1xf32>
    %213 = vector.broadcast %212 : vector<16x1xf32> to vector<16x16xf32>
    %214 = arith.divf %210, %213 : vector<16x16xf32>
    %cst_77 = arith.constant dense<0.000000e+00> : vector<16x16xf32>
    %215 = tpu.matmul %214, %203, %cst_77 {dimension_numbers = #tpu.dot_dimension_numbers<[1], [0], [0], [1], [0, 0, 1, 1], [], []>} : vector<16x16xf32>, vector<16x16xf32>, vector<16x16xf32> -> vector<16x16xf32>
    %216 = vector.extract_strided_slice %183 {offsets = [16, 0], sizes = [16, 32], strides = [1, 1]} : vector<32x32xf32> to vector<16x32xf32>
    %cst_78 = arith.constant dense<0.000000e+00> : vector<16x32xf32>
    %217 = tpu.matmul %215, %216, %cst_78 {dimension_numbers = #tpu.dot_dimension_numbers<[1], [0], [0], [1], [0, 0, 1, 1], [], []>} : vector<16x16xf32>, vector<16x32xf32>, vector<16x32xf32> -> vector<16x32xf32>
    %218 = arith.addf %200, %217 : vector<16x32xf32>
    %219 = arith.addf %142, %218 : vector<16x32xf32>
    %220 = vector.broadcast %149 : vector<1x32xf32> to vector<16x32xf32>
    %221 = arith.addf %219, %220 : vector<16x32xf32>
    %cst_79 = arith.constant dense<0.000000e+00> : vector<16xf32>
    %222 = vector.multi_reduction <add>, %221, %cst_79 [1] : vector<16x32xf32> to vector<16xf32>
    %223 = vector.shape_cast %222 : vector<16xf32> to vector<16x1xf32>
    %cst_80 = arith.constant 3.200000e+01 : f32
    %224 = vector.broadcast %cst_80 : f32 to vector<16x1xf32>
    %225 = arith.divf %223, %224 : vector<16x1xf32>
    %226 = vector.broadcast %225 : vector<16x1xf32> to vector<16x32xf32>
    %227 = arith.subf %221, %226 : vector<16x32xf32>
    %228 = arith.mulf %227, %227 : vector<16x32xf32>
    %cst_81 = arith.constant dense<0.000000e+00> : vector<16xf32>
    %229 = vector.multi_reduction <add>, %228, %cst_81 [1] : vector<16x32xf32> to vector<16xf32>
    %230 = vector.shape_cast %229 : vector<16xf32> to vector<16x1xf32>
    %cst_82 = arith.constant 3.200000e+01 : f32
    %231 = vector.broadcast %cst_82 : f32 to vector<16x1xf32>
    %232 = arith.divf %230, %231 : vector<16x1xf32>
    %233 = vector.broadcast %225 : vector<16x1xf32> to vector<16x32xf32>
    %234 = arith.subf %221, %233 : vector<16x32xf32>
    %cst_83 = arith.constant 9.99999974E-6 : f32
    %235 = vector.broadcast %cst_83 : f32 to vector<16x1xf32>
    %236 = arith.addf %232, %235 : vector<16x1xf32>
    %237 = math.rsqrt %236 : vector<16x1xf32>
    %238 = vector.broadcast %237 : vector<16x1xf32> to vector<16x32xf32>
    %239 = arith.mulf %234, %238 : vector<16x32xf32>
    %240 = vector.broadcast %147 : vector<1x32xf32> to vector<16x32xf32>
    %241 = arith.mulf %239, %240 : vector<16x32xf32>
    %242 = vector.broadcast %148 : vector<1x32xf32> to vector<16x32xf32>
    %243 = arith.addf %241, %242 : vector<16x32xf32>
    %c1_84 = arith.constant 1 : index
    %c0_85 = arith.constant 0 : index
    %c0_86 = arith.constant 0 : index
    %244 = vector.load %arg8[%c1_84, %c0_85, %c0_86] : memref<2x32x128xf32, #tpu.memory_space<vmem>>, vector<1x32x128xf32>
    %245 = vector.shape_cast %244 : vector<1x32x128xf32> to vector<32x128xf32>
    %cst_87 = arith.constant dense<0.000000e+00> : vector<16x128xf32>
    %246 = tpu.matmul %243, %245, %cst_87 {dimension_numbers = #tpu.dot_dimension_numbers<[1], [0], [0], [1], [0, 0, 1, 1], [], []>} : vector<16x32xf32>, vector<32x128xf32>, vector<16x128xf32> -> vector<16x128xf32>
    %247 = vector.broadcast %154 : vector<1x128xf32> to vector<16x128xf32>
    %248 = arith.addf %246, %247 : vector<16x128xf32>
    %cst_88 = arith.constant 5.000000e-01 : f32
    %249 = vector.broadcast %cst_88 : f32 to vector<16x128xf32>
    %250 = arith.mulf %249, %248 : vector<16x128xf32>
    %cst_89 = arith.constant 0.707106769 : f32
    %251 = vector.broadcast %cst_89 : f32 to vector<16x128xf32>
    %252 = arith.mulf %248, %251 : vector<16x128xf32>
    %253 = math.erf %252 : vector<16x128xf32>
    %cst_90 = arith.constant 1.000000e+00 : f32
    %254 = vector.broadcast %cst_90 : f32 to vector<16x128xf32>
    %255 = arith.addf %254, %253 : vector<16x128xf32>
    %256 = arith.mulf %250, %255 : vector<16x128xf32>
    %c1_91 = arith.constant 1 : index
    %c0_92 = arith.constant 0 : index
    %c0_93 = arith.constant 0 : index
    %257 = vector.load %arg9[%c1_91, %c0_92, %c0_93] : memref<2x128x32xf32, #tpu.memory_space<vmem>>, vector<1x128x32xf32>
    %258 = vector.shape_cast %257 : vector<1x128x32xf32> to vector<128x32xf32>
    %cst_94 = arith.constant dense<0.000000e+00> : vector<16x32xf32>
    %259 = tpu.matmul %256, %258, %cst_94 {dimension_numbers = #tpu.dot_dimension_numbers<[1], [0], [0], [1], [0, 0, 1, 1], [], []>} : vector<16x128xf32>, vector<128x32xf32>, vector<16x32xf32> -> vector<16x32xf32>
    %260 = vector.broadcast %150 : vector<1x32xf32> to vector<16x32xf32>
    %261 = arith.addf %259, %260 : vector<16x32xf32>
    %262 = arith.addf %221, %261 : vector<16x32xf32>
    %c0_95 = arith.constant 0 : index
    %c0_96 = arith.constant 0 : index
    %263 = vector.load %arg10[%c0_95, %c0_96] : memref<2x32xf32, #tpu.memory_space<vmem>>, vector<1x32xf32>
    %c1_97 = arith.constant 1 : index
    %c0_98 = arith.constant 0 : index
    %264 = vector.load %arg10[%c1_97, %c0_98] : memref<2x32xf32, #tpu.memory_space<vmem>>, vector<1x32xf32>
    %cst_99 = arith.constant dense<0.000000e+00> : vector<16xf32>
    %265 = vector.multi_reduction <add>, %262, %cst_99 [1] : vector<16x32xf32> to vector<16xf32>
    %266 = vector.shape_cast %265 : vector<16xf32> to vector<16x1xf32>
    %cst_100 = arith.constant 3.200000e+01 : f32
    %267 = vector.broadcast %cst_100 : f32 to vector<16x1xf32>
    %268 = arith.divf %266, %267 : vector<16x1xf32>
    %269 = vector.broadcast %268 : vector<16x1xf32> to vector<16x32xf32>
    %270 = arith.subf %262, %269 : vector<16x32xf32>
    %271 = arith.mulf %270, %270 : vector<16x32xf32>
    %cst_101 = arith.constant dense<0.000000e+00> : vector<16xf32>
    %272 = vector.multi_reduction <add>, %271, %cst_101 [1] : vector<16x32xf32> to vector<16xf32>
    %273 = vector.shape_cast %272 : vector<16xf32> to vector<16x1xf32>
    %cst_102 = arith.constant 3.200000e+01 : f32
    %274 = vector.broadcast %cst_102 : f32 to vector<16x1xf32>
    %275 = arith.divf %273, %274 : vector<16x1xf32>
    %276 = vector.broadcast %268 : vector<16x1xf32> to vector<16x32xf32>
    %277 = arith.subf %262, %276 : vector<16x32xf32>
    %cst_103 = arith.constant 9.99999974E-6 : f32
    %278 = vector.broadcast %cst_103 : f32 to vector<16x1xf32>
    %279 = arith.addf %275, %278 : vector<16x1xf32>
    %280 = math.rsqrt %279 : vector<16x1xf32>
    %281 = vector.broadcast %280 : vector<16x1xf32> to vector<16x32xf32>
    %282 = arith.mulf %277, %281 : vector<16x32xf32>
    %283 = vector.broadcast %263 : vector<1x32xf32> to vector<16x32xf32>
    %284 = arith.mulf %282, %283 : vector<16x32xf32>
    %285 = vector.broadcast %264 : vector<1x32xf32> to vector<16x32xf32>
    %286 = arith.addf %284, %285 : vector<16x32xf32>
    %c0_104 = arith.constant 0 : index
    %c0_105 = arith.constant 0 : index
    %287 = vector.load %arg11[%c0_104, %c0_105] : memref<32x128xf32, #tpu.memory_space<vmem>>, vector<32x128xf32>
    %cst_106 = arith.constant dense<0.000000e+00> : vector<16x128xf32>
    %288 = tpu.matmul %286, %287, %cst_106 {dimension_numbers = #tpu.dot_dimension_numbers<[1], [0], [0], [1], [0, 0, 1, 1], [], []>} : vector<16x32xf32>, vector<32x128xf32>, vector<16x128xf32> -> vector<16x128xf32>
    %c0_107 = arith.constant 0 : index
    %c0_108 = arith.constant 0 : index
    %289 = vector.load %arg12[%c0_107, %c0_108] : memref<16x128xf32, #tpu.memory_space<vmem>>, vector<16x128xf32>
    tpu.vector_store %arg12[%c0_107, %c0_108], %288 {strides = array<i32>} : memref<16x128xf32, #tpu.memory_space<vmem>>, vector<16x128xf32>,
    return
  }
  func.func @transform_0(%arg0: i32) -> (i32, i32) {
    %c0_i32 = arith.constant 0 : i32
    %c0_i32_0 = arith.constant 0 : i32
    %c0_i32_1 = arith.constant 0 : i32
    return %c0_i32, %c0_i32_0 : i32, i32
  }
  func.func @transform_1(%arg0: i32) -> (i32, i32) {
    %c0_i32 = arith.constant 0 : i32
    %c0_i32_0 = arith.constant 0 : i32
    %c0_i32_1 = arith.constant 0 : i32
    return %c0_i32, %c0_i32_0 : i32, i32
  }
  func.func @transform_2(%arg0: i32) -> (i32, i32) {
    %c0_i32 = arith.constant 0 : i32
    %c0_i32_0 = arith.constant 0 : i32
    %c0_i32_1 = arith.constant 0 : i32
    return %c0_i32, %c0_i32_0 : i32, i32
  }
  func.func @transform_3(%arg0: i32) -> (i32, i32, i32) {
    %c0_i32 = arith.constant 0 : i32
    %c0_i32_0 = arith.constant 0 : i32
    %c0_i32_1 = arith.constant 0 : i32
    %c0_i32_2 = arith.constant 0 : i32
    return %c0_i32, %c0_i32_0, %c0_i32_1 : i32, i32, i32
  }
  func.func @transform_4(%arg0: i32) -> (i32, i32, i32) {
    %c0_i32 = arith.constant 0 : i32
    %c0_i32_0 = arith.constant 0 : i32
    %c0_i32_1 = arith.constant 0 : i32
    %c0_i32_2 = arith.constant 0 : i32
    return %c0_i32, %c0_i32_0, %c0_i32_1 : i32, i32, i32
  }
  func.func @transform_5(%arg0: i32) -> (i32, i32, i32) {
    %c0_i32 = arith.constant 0 : i32
    %c0_i32_0 = arith.constant 0 : i32
    %c0_i32_1 = arith.constant 0 : i32
    %c0_i32_2 = arith.constant 0 : i32
    return %c0_i32, %c0_i32_0, %c0_i32_1 : i32, i32, i32
  }
  func.func @transform_6(%arg0: i32) -> (i32, i32, i32) {
    %c0_i32 = arith.constant 0 : i32
    %c0_i32_0 = arith.constant 0 : i32
    %c0_i32_1 = arith.constant 0 : i32
    %c0_i32_2 = arith.constant 0 : i32
    return %c0_i32, %c0_i32_0, %c0_i32_1 : i32, i32, i32
  }
  func.func @transform_7(%arg0: i32) -> (i32, i32, i32) {
    %c0_i32 = arith.constant 0 : i32
    %c0_i32_0 = arith.constant 0 : i32
    %c0_i32_1 = arith.constant 0 : i32
    %c0_i32_2 = arith.constant 0 : i32
    return %c0_i32, %c0_i32_0, %c0_i32_1 : i32, i32, i32
  }
  func.func @transform_8(%arg0: i32) -> (i32, i32, i32) {
    %c0_i32 = arith.constant 0 : i32
    %c0_i32_0 = arith.constant 0 : i32
    %c0_i32_1 = arith.constant 0 : i32
    %c0_i32_2 = arith.constant 0 : i32
    return %c0_i32, %c0_i32_0, %c0_i32_1 : i32, i32, i32
  }
  func.func @transform_9(%arg0: i32) -> (i32, i32) {
    %c0_i32 = arith.constant 0 : i32
    %c0_i32_0 = arith.constant 0 : i32
    %c0_i32_1 = arith.constant 0 : i32
    return %c0_i32, %c0_i32_0 : i32, i32
  }
  func.func @transform_10(%arg0: i32) -> (i32, i32) {
    %c0_i32 = arith.constant 0 : i32
    %c0_i32_0 = arith.constant 0 : i32
    %c0_i32_1 = arith.constant 0 : i32
    return %c0_i32, %c0_i32_0 : i32, i32
  }
  func.func @transform_11(%arg0: i32) -> (i32, i32) {
    %c0_i32 = arith.constant 0 : i32
    %c0_i32_0 = arith.constant 0 : i32
    %c0_i32_1 = arith.constant 0 : i32
    return %c0_i32, %c0_i32_0 : i32, i32
  }
}

</mosaic_0001>

<llo_original>
// kernel: _lambda_.1
$region0: #{_lambda_.1}
  #allocation0 [shape = 'u32[]', space=smem, size = 0x4, offset = 0x4, fixed_abs, tag = 'smem constant byte address 0x4 - core index']
  #allocation1 [shape = 'u32[144,128]{1,0:T(1,128)}', space=vmem, size = 0x12000, scoped, tag = 'internal scratch']
  %s0 = inlined_call_operand.vmem [shape: s32[16,1], index: 0, kind: input, shape index: {}]
  %s1 = inlined_call_operand.vmem [shape: f32[64,32], index: 1, kind: input, shape index: {}]
  %s2 = inlined_call_operand.vmem [shape: f32[8,32], index: 2, kind: input, shape index: {}]
  %s3 = inlined_call_operand.vmem [shape: f32[2,6,32], index: 3, kind: input, shape index: {}]
  %s4 = inlined_call_operand.vmem [shape: f32[2,2,128], index: 4, kind: input, shape index: {}]
  %s5 = inlined_call_operand.vmem [shape: f32[2,32,96], index: 5, kind: input, shape index: {}]
  %s6 = inlined_call_operand.vmem [shape: f32[2,32,32], index: 6, kind: input, shape index: {}]
  %s7 = inlined_call_operand.vmem [shape: f32[2,32,128], index: 7, kind: input, shape index: {}]
  %s8 = inlined_call_operand.vmem [shape: f32[2,128,32], index: 8, kind: input, shape index: {}]
  %s9 = inlined_call_operand.vmem [shape: f32[2,32], index: 9, kind: input, shape index: {}]
  %s10 = inlined_call_operand.vmem [shape: f32[32,128], index: 10, kind: input, shape index: {}]
  %s11 = inlined_call_operand.hbm [shape: f32[16,128], index: 11, kind: output, shape index: {}]
  %s12 = sld [smem:[#allocation0]]
  $region54: #{_lambda_.1} parent=0
    _
  %s14 = ssub.s32 1, %s12
  %s15 = scalar_select 0, %s14, %s12
  $region1: #{_lambda_.1} parent=0
    #allocation2 [shape = 'u8[8192]{0}', space=vmem, size = 0x2000, scoped, tag = 'output window, operand 0, single buffered']
    #allocation3 [shape = 's32[1]{0}', space=sflag, size = 0x4, scoped, tag = 'scoped memory for _lambda_.1']
    %16 = vsyncpa [#allocation3], 0
    // Predicated region
    $region2: #{_lambda_.1} parent=1 // pred_check
      _
    $region3: #{_lambda_.1} parent=1 // pred_check_branch
      %18 = sbr.rel (0) target = $region5
    $region4: #{_lambda_.1} parent=1 // pred_region
      _
    $region5: #{_lambda_.1} parent=1 // pred_fallthru
      _
    // Predicated region
    $region6: #{_lambda_.1} parent=1 // pred_check
      _
    $region7: #{_lambda_.1} parent=1 // pred_check_branch
      %20 = sbr.rel (0) target = $region9
    $region8: #{_lambda_.1} parent=1 // pred_region
      _
    $region9: #{_lambda_.1} parent=1 // pred_fallthru
      _
    // Predicated region
    $region10: #{_lambda_.1} parent=1 // pred_check
      _
    $region11: #{_lambda_.1} parent=1 // pred_check_branch
      %22 = sbr.rel (0) target = $region13
    $region12: #{_lambda_.1} parent=1 // pred_region
      _
    $region13: #{_lambda_.1} parent=1 // pred_fallthru
      _
    // Predicated region
    $region14: #{_lambda_.1} parent=1 // pred_check
      _
    $region15: #{_lambda_.1} parent=1 // pred_check_branch
      %24 = sbr.rel (0) target = $region17
    $region16: #{_lambda_.1} parent=1 // pred_region
      _
    $region17: #{_lambda_.1} parent=1 // pred_fallthru
      _
    // Predicated region
    $region18: #{_lambda_.1} parent=1 // pred_check
      _
    $region19: #{_lambda_.1} parent=1 // pred_check_branch
      %26 = sbr.rel (0) target = $region21
    $region20: #{_lambda_.1} parent=1 // pred_region
      _
    $region21: #{_lambda_.1} parent=1 // pred_fallthru
      _
    // Predicated region
    $region22: #{_lambda_.1} parent=1 // pred_check
      _
    $region23: #{_lambda_.1} parent=1 // pred_check_branch
      %28 = sbr.rel (0) target = $region25
    $region24: #{_lambda_.1} parent=1 // pred_region
      _
    $region25: #{_lambda_.1} parent=1 // pred_fallthru
      _
    // Predicated region
    $region26: #{_lambda_.1} parent=1 // pred_check
      _
    $region27: #{_lambda_.1} parent=1 // pred_check_branch
      %30 = sbr.rel (0) target = $region29
    $region28: #{_lambda_.1} parent=1 // pred_region
      _
    $region29: #{_lambda_.1} parent=1 // pred_fallthru
      _
    // Predicated region
    $region30: #{_lambda_.1} parent=1 // pred_check
      _
    $region31: #{_lambda_.1} parent=1 // pred_check_branch
      %32 = sbr.rel (0) target = $region33
    $region32: #{_lambda_.1} parent=1 // pred_region
      _
    $region33: #{_lambda_.1} parent=1 // pred_fallthru
      _
    // Predicated region
    $region34: #{_lambda_.1} parent=1 // pred_check
      _
    $region35: #{_lambda_.1} parent=1 // pred_check_branch
      %34 = sbr.rel (0) target = $region37
    $region36: #{_lambda_.1} parent=1 // pred_region
      _
    $region37: #{_lambda_.1} parent=1 // pred_fallthru
      _
    // Predicated region
    $region38: #{_lambda_.1} parent=1 // pred_check
      _
    $region39: #{_lambda_.1} parent=1 // pred_check_branch
      %36 = sbr.rel (0) target = $region41
    $region40: #{_lambda_.1} parent=1 // pred_region
      _
    $region41: #{_lambda_.1} parent=1 // pred_fallthru
      _
    // Predicated region
    $region42: #{_lambda_.1} parent=1 // pred_check
      _
    $region43: #{_lambda_.1} parent=1 // pred_check_branch
      %38 = sbr.rel (0) target = $region45
    $region44: #{_lambda_.1} parent=1 // pred_region
      _
    $region45: #{_lambda_.1} parent=1 // pred_fallthru
      _
    %v39 = vld [vmem:[%s0] sm:$0xff]
    %v40 = vld [vmem:[%s0 + $0x8] sm:$0xff]
    %v41 = vlaneseq
    %v42 = vand.u32 %v41, 127
    %43 = vset.pattern.permute.xlu0 0
    %44 = vperm.xlu0 %43, %v39
    %v45 = vpop.permute.xlu0 %44
    %46 = vset.pattern.permute.xlu0 0
    %47 = vperm.xlu0 %46, %v40
    %v48 = vpop.permute.xlu0 %47
    %vm49 = vcmp.eq.s32.totalorder %v45, %v42
    %vm50 = vcmp.eq.s32.totalorder %v48, %v42
    %v51 = vsel %vm49, 1, 0
    %v52 = vsel %vm50, 1, 0
    %v53 = vcvt.s32.f32 %v51
    %v54 = vcvt.s32.f32 %v52
    %v55 = vld [vmem:[%s1] sm:$0xff]
    %v56 = vld [vmem:[%s1 + $0x8] sm:$0xff]
    %v57 = vld [vmem:[%s1 + $0x10] sm:$0xff]
    %v58 = vld [vmem:[%s1 + $0x18] sm:$0xff]
    %v59 = vld [vmem:[%s1 + $0x20] sm:$0xff]
    %v60 = vld [vmem:[%s1 + $0x28] sm:$0xff]
    %v61 = vld [vmem:[%s1 + $0x30] sm:$0xff]
    %v62 = vld [vmem:[%s1 + $0x38] sm:$0xff]
    %v63 = vld [vmem:[%s2] sm:$0xff]
    %vm64 = vcmask 523264
    %v66 = vsel %vm64, %v53, 0
    %v69 = vsel %vm64, %v54, 0
    %71 = vmatprep.subr.mxu0 0.0
    %72 = vmatpush1.msra.mxu0 0.0
    %73 = vmatprep.subr.mxu0 0.0
    %74 = vmatpush1.msra.mxu0 0.0
    %75 = vmatprep.subr.mxu0 0.0
    %76 = vmatpush1.msra.mxu0 0.0
    %77 = vmatprep.subr.mxu0 0.0
    %78 = vmatpush1.msra.mxu0 0.0
    %79 = vmatprep.subr.mxu0 0.0
    %80 = vmatpush1.msra.mxu0 0.0
    %81 = vmatprep.subr.mxu0 0.0
    %82 = vmatpush1.msra.mxu0 0.0
    %83 = vmatprep.subr.mxu0 0.0
    %84 = vmatpush1.msra.mxu0 0.0
    %85 = vmatprep.subr.mxu0 0.0
    %86 = vmatpush1.msra.mxu0 0.0
    %87 = vmatprep.subr.mxu0 0.0
    %88 = vmatpush1.msra.mxu0 %v62
    %89 = vmatprep.subr.mxu0 0.0
    %90 = vmatpush1.msra.mxu0 %v61
    %91 = vmatprep.subr.mxu0 0.0
    %92 = vmatpush1.msra.mxu0 %v60
    %93 = vmatprep.subr.mxu0 0.0
    %94 = vmatpush1.msra.mxu0 %v59
    %95 = vmatprep.subr.mxu0 0.0
    %96 = vmatpush1.msra.mxu0 %v58
    %97 = vmatprep.subr.mxu0 0.0
    %98 = vmatpush1.msra.mxu0 %v57
    %99 = vmatprep.subr.mxu0 0.0
    %100 = vmatpush1.msra.mxu0 %v56
    %101 = vmatprep.subr.mxu0 0.0
    %102 = vmatpush1.msra.mxu0 %v55
    %103 = vmatprep.subr.mxu0 0.0
    %104 = vmatpush2.msra.mxu0 0.0
    %105 = vmatprep.subr.mxu0 0.0
    %106 = vmatpush2.msra.mxu0 0.0
    %107 = vmatprep.subr.mxu0 0.0
    %108 = vmatpush2.msra.mxu0 0.0
    %109 = vmatprep.subr.mxu0 0.0
    %110 = vmatpush2.msra.mxu0 0.0
    %111 = vmatprep.subr.mxu0 0.0
    %112 = vmatpush2.msra.mxu0 0.0
    %113 = vmatprep.subr.mxu0 0.0
    %114 = vmatpush2.msra.mxu0 0.0
    %115 = vmatprep.subr.mxu0 0.0
    %116 = vmatpush2.msra.mxu0 0.0
    %117 = vmatprep.subr.mxu0 0.0
    %118 = vmatpush2.msra.mxu0 0.0
    %119 = vmatprep.subr.mxu0 0.0
    %120 = vmatpush2.msra.mxu0 0.0
    %121 = vmatprep.subr.mxu0 0.0
    %122 = vmatpush2.msra.mxu0 0.0
    %123 = vmatprep.subr.mxu0 0.0
    %124 = vmatpush2.msra.mxu0 0.0
    %125 = vmatprep.subr.mxu0 0.0
    %126 = vmatpush2.msra.mxu0 0.0
    %127 = vmatprep.subr.mxu0 0.0
    %128 = vmatpush2.msra.mxu0 0.0
    %129 = vmatprep.subr.mxu0 0.0
    %130 = vmatpush2.msra.mxu0 0.0
    %131 = vmatprep.subr.mxu0 0.0
    %132 = vmatpush2.msra.mxu0 0.0
    %133 = vmatprep.subr.mxu0 0.0
    %134 = vmatpush2.msra.mxu0 0.0
    %135 = vmatprep.mubr.f32.mxu0 0.0
    %136 = vmatmul.mubr.f32.gmra.mxu0 %v66
    %v137 = vpop.f32.mrf.mxu0
    %v138 = vadd.f32 %v63, %v137
    %v139 = vpop.f32.mrf.mxu0
    %140 = vmatprep.mubr.f32.mxu0 0.0
    %141 = vmatmul.mubr.f32.gmra.mxu0 %v69
    %v142 = vpop.f32.mrf.mxu0
    %v143 = vadd.f32 %v63, %v142
    %v144 = vpop.f32.mrf.mxu0
    %145 = vdwg.mxu0
    %v146 = vlaneseq
    %v147 = vshrl.u32 %v146, 7
    %v148 = vadd.s32 %v147, 8
    %v149 = vshrl.u32 %v147, 3
    %v150 = vshrl.u32 %v148, 3
    %v151 = vshrl.u32 %v42, 3
    %vm152 = vcmp.eq.s32.totalorder %v149, %v151
    %vm153 = vcmp.eq.s32.totalorder %v150, %v151
    %vm154 = vcmp.ge.s32.totalorder %v147, %v42
    %vm155 = vcmp.ge.s32.totalorder %v148, %v42
    %vm156 = vmand %vm152, %vm154
    %vm157 = vmand %vm153, %vm155
    %v158 = vsel %vm156, 0.0, -1e+30
    %v159 = vsel %vm157, 0.0, -1e+30
    %v160 = vld [vmem:[%s3] sm:$0x3f]
    %v161 = vld [vmem:[%s4] sm:$0x3]
    %vm162 = vcmask 261120
    %v163 = vsel %vm162, %v138, 0.0
    %164 = vadd.xlane.f32.xlu0 %v163
    %v165 = vpop.xlane.xlu0 %164
    %v166 = vsel %vm162, %v143, 0.0
    %167 = vadd.xlane.f32.xlu0 %v166
    %v168 = vpop.xlane.xlu0 %167
    %v169 = vrcp.pop 32.0
    %v170 = vmul.f32 %v165, %v169
    %v171 = vmul.f32 %v168, %v169
    %v172 = vsub.f32 %v138, %v170
    %v173 = vsub.f32 %v143, %v171
    %v174 = vmul.f32 %v172, %v172
    %v175 = vmul.f32 %v173, %v173
    %v176 = vsel %vm162, %v174, 0.0
    %177 = vadd.xlane.f32.xlu0 %v176
    %v178 = vpop.xlane.xlu0 %177
    %v179 = vsel %vm162, %v175, 0.0
    %180 = vadd.xlane.f32.xlu0 %v179
    %v181 = vpop.xlane.xlu0 %180
    %v182 = vmul.f32 %v178, %v169
    %v183 = vmul.f32 %v181, %v169
    %v184 = vadd.f32 %v182, 1e-05
    %v185 = vadd.f32 %v183, 1e-05
    %v186 = vrsqrt.pop %v184
    %v187 = vrsqrt.pop %v185
    %v188 = vmul.f32 %v172, %v186
    %v189 = vmul.f32 %v173, %v187
    %v190 = vlaneseq
    %v191 = vshrl.u32 %v190, 7
    %v192 = vsub.s32 0, %v191
    %v193 = vrot.slane %v160, %v192
    %v194 = vmul.f32 %v188, %v193
    %v195 = vmul.f32 %v189, %v193
    %v196 = vlaneseq
    %v197 = vshrl.u32 %v196, 7
    %v198 = vsub.s32 1, %v197
    %v199 = vrot.slane %v160, %v198
    %v200 = vadd.f32 %v194, %v199
    %v201 = vadd.f32 %v195, %v199
    %v202 = vld [vmem:[%s5] sm:$0xff]
    %v203 = vld [vmem:[%s5 + $0x8] sm:$0xff]
    %v204 = vld [vmem:[%s5 + $0x10] sm:$0xff]
    %v205 = vld [vmem:[%s5 + $0x18] sm:$0xff]
    %v206 = vlaneseq
    %v207 = vshrl.u32 %v206, 7
    %v208 = vsub.s32 0, %v207
    %v209 = vrot.slane %v161, %v208
    %v211 = vsel %vm162, %v200, 0
    %v214 = vsel %vm162, %v201, 0
    %216 = vmatprep.subr.mxu0 0.0
    %217 = vmatpush1.msra.mxu0 0.0
    %218 = vmatprep.subr.mxu0 0.0
    %219 = vmatpush1.msra.mxu0 0.0
    %220 = vmatprep.subr.mxu0 0.0
    %221 = vmatpush1.msra.mxu0 0.0
    %222 = vmatprep.subr.mxu0 0.0
    %223 = vmatpush1.msra.mxu0 0.0
    %224 = vmatprep.subr.mxu0 0.0
    %225 = vmatpush1.msra.mxu0 0.0
    %226 = vmatprep.subr.mxu0 0.0
    %227 = vmatpush1.msra.mxu0 0.0
    %228 = vmatprep.subr.mxu0 0.0
    %229 = vmatpush1.msra.mxu0 0.0
    %230 = vmatprep.subr.mxu0 0.0
    %231 = vmatpush1.msra.mxu0 0.0
    %232 = vmatprep.subr.mxu0 0.0
    %233 = vmatpush1.msra.mxu0 0.0
    %234 = vmatprep.subr.mxu0 0.0
    %235 = vmatpush1.msra.mxu0 0.0
    %236 = vmatprep.subr.mxu0 0.0
    %237 = vmatpush1.msra.mxu0 0.0
    %238 = vmatprep.subr.mxu0 0.0
    %239 = vmatpush1.msra.mxu0 0.0
    %240 = vmatprep.subr.mxu0 0.0
    %241 = vmatpush1.msra.mxu0 %v205
    %242 = vmatprep.subr.mxu0 0.0
    %243 = vmatpush1.msra.mxu0 %v204
    %244 = vmatprep.subr.mxu0 0.0
    %245 = vmatpush1.msra.mxu0 %v203
    %246 = vmatprep.subr.mxu0 0.0
    %247 = vmatpush1.msra.mxu0 %v202
    %248 = vmatprep.subr.mxu0 0.0
    %249 = vmatpush2.msra.mxu0 0.0
    %250 = vmatprep.subr.mxu0 0.0
    %251 = vmatpush2.msra.mxu0 0.0
    %252 = vmatprep.subr.mxu0 0.0
    %253 = vmatpush2.msra.mxu0 0.0
    %254 = vmatprep.subr.mxu0 0.0
    %255 = vmatpush2.msra.mxu0 0.0
    %256 = vmatprep.subr.mxu0 0.0
    %257 = vmatpush2.msra.mxu0 0.0
    %258 = vmatprep.subr.mxu0 0.0
    %259 = vmatpush2.msra.mxu0 0.0
    %260 = vmatprep.subr.mxu0 0.0
    %261 = vmatpush2.msra.mxu0 0.0
    %262 = vmatprep.subr.mxu0 0.0
    %263 = vmatpush2.msra.mxu0 0.0
    %264 = vmatprep.subr.mxu0 0.0
    %265 = vmatpush2.msra.mxu0 0.0
    %266 = vmatprep.subr.mxu0 0.0
    %267 = vmatpush2.msra.mxu0 0.0
    %268 = vmatprep.subr.mxu0 0.0
    %269 = vmatpush2.msra.mxu0 0.0
    %270 = vmatprep.subr.mxu0 0.0
    %271 = vmatpush2.msra.mxu0 0.0
    %272 = vmatprep.subr.mxu0 0.0
    %273 = vmatpush2.msra.mxu0 0.0
    %274 = vmatprep.subr.mxu0 0.0
    %275 = vmatpush2.msra.mxu0 0.0
    %276 = vmatprep.subr.mxu0 0.0
    %277 = vmatpush2.msra.mxu0 0.0
    %278 = vmatprep.subr.mxu0 0.0
    %279 = vmatpush2.msra.mxu0 0.0
    %280 = vmatprep.mubr.f32.mxu0 0.0
    %281 = vmatmul.mubr.f32.gmra.mxu0 %v211
    %v282 = vpop.f32.mrf.mxu0
    %v283 = vadd.f32 %v209, %v282
    %v284 = vpop.f32.mrf.mxu0
    %285 = vmatprep.mubr.f32.mxu0 0.0
    %286 = vmatmul.mubr.f32.gmra.mxu0 %v214
    %v287 = vpop.f32.mrf.mxu0
    %v288 = vadd.f32 %v209, %v287
    %v289 = vpop.f32.mrf.mxu0
    %290 = vdwg.mxu0
    %v291 = vld [vmem:[%s6] sm:$0xff]
    %v292 = vld [vmem:[%s6 + $0x8] sm:$0xff]
    %v293 = vld [vmem:[%s6 + $0x10] sm:$0xff]
    %v294 = vld [vmem:[%s6 + $0x18] sm:$0xff]
    %297 = vrot.lane.b32.xlu0 %v283, 96
    %v298 = vpop.permute.xlu0 %297
    %299 = vrot.lane.b32.xlu0 %v288, 96
    %v300 = vpop.permute.xlu0 %299
    %vm301 = vcmask 130048
    %v302 = vsel %vm301, %v283, 0
    %v304 = vsel %vm301, %v288, 0
    %v306 = vsel %vm301, %v298, 0
    %v308 = vsel %vm301, %v300, 0
    %310 = vmatprep.subr.mxu0 0.0
    %311 = vmatpush1.xpose.msra.mxu0 0.0
    %312 = vmatprep.subr.mxu0 0.0
    %313 = vmatpush1.xpose.msra.mxu0 0.0
    %314 = vmatprep.subr.mxu0 0.0
    %315 = vmatpush1.xpose.msra.mxu0 0.0
    %316 = vmatprep.subr.mxu0 0.0
    %317 = vmatpush1.xpose.msra.mxu0 0.0
    %318 = vmatprep.subr.mxu0 0.0
    %319 = vmatpush1.xpose.msra.mxu0 0.0
    %320 = vmatprep.subr.mxu0 0.0
    %321 = vmatpush1.xpose.msra.mxu0 0.0
    %322 = vmatprep.subr.mxu0 0.0
    %323 = vmatpush1.xpose.msra.mxu0 0.0
    %324 = vmatprep.subr.mxu0 0.0
    %325 = vmatpush1.xpose.msra.mxu0 0.0
    %326 = vmatprep.subr.mxu0 0.0
    %327 = vmatpush1.xpose.msra.mxu0 0.0
    %328 = vmatprep.subr.mxu0 0.0
    %329 = vmatpush1.xpose.msra.mxu0 0.0
    %330 = vmatprep.subr.mxu0 0.0
    %331 = vmatpush1.xpose.msra.mxu0 0.0
    %332 = vmatprep.subr.mxu0 0.0
    %333 = vmatpush1.xpose.msra.mxu0 0.0
    %334 = vmatprep.subr.mxu0 0.0
    %335 = vmatpush1.xpose.msra.mxu0 0.0
    %336 = vmatprep.subr.mxu0 0.0
    %337 = vmatpush1.xpose.msra.mxu0 0.0
    %338 = vmatprep.subr.mxu0 0.0
    %339 = vmatpush1.xpose.msra.mxu0 %v308
    %340 = vmatprep.subr.mxu0 0.0
    %341 = vmatpush1.xpose.msra.mxu0 %v306
    %342 = vmatprep.subr.mxu0 0.0
    %343 = vmatpush2.xpose.msra.mxu0 0.0
    %344 = vmatprep.subr.mxu0 0.0
    %345 = vmatpush2.xpose.msra.mxu0 0.0
    %346 = vmatprep.subr.mxu0 0.0
    %347 = vmatpush2.xpose.msra.mxu0 0.0
    %348 = vmatprep.subr.mxu0 0.0
    %349 = vmatpush2.xpose.msra.mxu0 0.0
    %350 = vmatprep.subr.mxu0 0.0
    %351 = vmatpush2.xpose.msra.mxu0 0.0
    %352 = vmatprep.subr.mxu0 0.0
    %353 = vmatpush2.xpose.msra.mxu0 0.0
    %354 = vmatprep.subr.mxu0 0.0
    %355 = vmatpush2.xpose.msra.mxu0 0.0
    %356 = vmatprep.subr.mxu0 0.0
    %357 = vmatpush2.xpose.msra.mxu0 0.0
    %358 = vmatprep.subr.mxu0 0.0
    %359 = vmatpush2.xpose.msra.mxu0 0.0
    %360 = vmatprep.subr.mxu0 0.0
    %361 = vmatpush2.xpose.msra.mxu0 0.0
    %362 = vmatprep.subr.mxu0 0.0
    %363 = vmatpush2.xpose.msra.mxu0 0.0
    %364 = vmatprep.subr.mxu0 0.0
    %365 = vmatpush2.xpose.msra.mxu0 0.0
    %366 = vmatprep.subr.mxu0 0.0
    %367 = vmatpush2.xpose.msra.mxu0 0.0
    %368 = vmatprep.subr.mxu0 0.0
    %369 = vmatpush2.xpose.msra.mxu0 0.0
    %370 = vmatprep.subr.mxu0 0.0
    %371 = vmatpush2.xpose.msra.mxu0 0.0
    %372 = vmatprep.subr.mxu0 0.0
    %373 = vmatpush2.xpose.msra.mxu0 0.0
    %374 = vmatprep.mubr.f32.mxu0 0.0
    %375 = vmatmul.mubr.f32.gmra.mxu0 %v302
    %v376 = vpop.f32.mrf.mxu0
    %v377 = vadd.f32 %v158, %v376
    %v378 = vpop.f32.mrf.mxu0
    %379 = vmatprep.mubr.f32.mxu0 0.0
    %380 = vmatmul.mubr.f32.gmra.mxu0 %v304
    %v381 = vpop.f32.mrf.mxu0
    %v382 = vadd.f32 %v159, %v381
    %v383 = vpop.f32.mrf.mxu0
    %384 = vdwg.mxu0
    %v385 = vsel %vm301, %v377, -inf
    %386 = vmax.xlane.f32.xlu0 %v385
    %v387 = vpop.xlane.xlu0 %386
    %v388 = vsel %vm301, %v382, -inf
    %389 = vmax.xlane.f32.xlu0 %v388
    %v390 = vpop.xlane.xlu0 %389
    %v391 = vsub.f32 %v377, %v387
    %v392 = vsub.f32 %v382, %v390
    %v393 = vmul.f32 %v391, 1.442695
    %v394 = vpow.pop %v393
    %v395 = vmul.f32 %v392, 1.442695
    %v396 = vpow.pop %v395
    %v397 = vsel %vm301, %v394, 0.0
    %398 = vadd.xlane.f32.xlu0 %v397
    %v399 = vpop.xlane.xlu0 %398
    %v400 = vsel %vm301, %v396, 0.0
    %401 = vadd.xlane.f32.xlu0 %v400
    %v402 = vpop.xlane.xlu0 %401
    %v403 = vrcp.pop %v399
    %v404 = vmul.f32 %v394, %v403
    %v405 = vrcp.pop %v402
    %v406 = vmul.f32 %v396, %v405
    %407 = vrot.lane.b32.xlu0 %v283, 64
    %v408 = vpop.permute.xlu0 %407
    %409 = vrot.lane.b32.xlu0 %v288, 64
    %v410 = vpop.permute.xlu0 %409
    %v414 = vsel %vm301, %v404, 0
    %v417 = vsel %vm301, %v406, 0
    %419 = vmatprep.subr.mxu0 0.0
    %420 = vmatpush1.msra.mxu0 0.0
    %421 = vmatprep.subr.mxu0 0.0
    %422 = vmatpush1.msra.mxu0 0.0
    %423 = vmatprep.subr.mxu0 0.0
    %424 = vmatpush1.msra.mxu0 0.0
    %425 = vmatprep.subr.mxu0 0.0
    %426 = vmatpush1.msra.mxu0 0.0
    %427 = vmatprep.subr.mxu0 0.0
    %428 = vmatpush1.msra.mxu0 0.0
    %429 = vmatprep.subr.mxu0 0.0
    %430 = vmatpush1.msra.mxu0 0.0
    %431 = vmatprep.subr.mxu0 0.0
    %432 = vmatpush1.msra.mxu0 0.0
    %433 = vmatprep.subr.mxu0 0.0
    %434 = vmatpush1.msra.mxu0 0.0
    %435 = vmatprep.subr.mxu0 0.0
    %436 = vmatpush1.msra.mxu0 0.0
    %437 = vmatprep.subr.mxu0 0.0
    %438 = vmatpush1.msra.mxu0 0.0
    %439 = vmatprep.subr.mxu0 0.0
    %440 = vmatpush1.msra.mxu0 0.0
    %441 = vmatprep.subr.mxu0 0.0
    %442 = vmatpush1.msra.mxu0 0.0
    %443 = vmatprep.subr.mxu0 0.0
    %444 = vmatpush1.msra.mxu0 0.0
    %445 = vmatprep.subr.mxu0 0.0
    %446 = vmatpush1.msra.mxu0 0.0
    %447 = vmatprep.subr.mxu0 0.0
    %448 = vmatpush1.msra.mxu0 %v410
    %449 = vmatprep.subr.mxu0 0.0
    %450 = vmatpush1.msra.mxu0 %v408
    %451 = vmatprep.subr.mxu0 0.0
    %452 = vmatpush2.msra.mxu0 0.0
    %453 = vmatprep.subr.mxu0 0.0
    %454 = vmatpush2.msra.mxu0 0.0
    %455 = vmatprep.subr.mxu0 0.0
    %456 = vmatpush2.msra.mxu0 0.0
    %457 = vmatprep.subr.mxu0 0.0
    %458 = vmatpush2.msra.mxu0 0.0
    %459 = vmatprep.subr.mxu0 0.0
    %460 = vmatpush2.msra.mxu0 0.0
    %461 = vmatprep.subr.mxu0 0.0
    %462 = vmatpush2.msra.mxu0 0.0
    %463 = vmatprep.subr.mxu0 0.0
    %464 = vmatpush2.msra.mxu0 0.0
    %465 = vmatprep.subr.mxu0 0.0
    %466 = vmatpush2.msra.mxu0 0.0
    %467 = vmatprep.subr.mxu0 0.0
    %468 = vmatpush2.msra.mxu0 0.0
    %469 = vmatprep.subr.mxu0 0.0
    %470 = vmatpush2.msra.mxu0 0.0
    %471 = vmatprep.subr.mxu0 0.0
    %472 = vmatpush2.msra.mxu0 0.0
    %473 = vmatprep.subr.mxu0 0.0
    %474 = vmatpush2.msra.mxu0 0.0
    %475 = vmatprep.subr.mxu0 0.0
    %476 = vmatpush2.msra.mxu0 0.0
    %477 = vmatprep.subr.mxu0 0.0
    %478 = vmatpush2.msra.mxu0 0.0
    %479 = vmatprep.subr.mxu0 0.0
    %480 = vmatpush2.msra.mxu0 0.0
    %481 = vmatprep.subr.mxu0 0.0
    %482 = vmatpush2.msra.mxu0 0.0
    %483 = vmatprep.mubr.f32.mxu0 0.0
    %484 = vmatmul.mubr.f32.gmra.mxu0 %v414
    %v485 = vpop.f32.mrf.mxu0
    %v486 = vadd.f32 0.0, %v485
    %v487 = vpop.f32.mrf.mxu0
    %488 = vmatprep.mubr.f32.mxu0 0.0
    %489 = vmatmul.mubr.f32.gmra.mxu0 %v417
    %v490 = vpop.f32.mrf.mxu0
    %v491 = vadd.f32 0.0, %v490
    %v492 = vpop.f32.mrf.mxu0
    %493 = vdwg.mxu0
    %494 = vrot.lane.b32.xlu0 %v283, 112
    %v495 = vpop.permute.xlu0 %494
    %496 = vrot.lane.b32.xlu0 %v288, 112
    %v497 = vpop.permute.xlu0 %496
    %498 = vrot.lane.b32.xlu0 %v283, 80
    %v499 = vpop.permute.xlu0 %498
    %500 = vrot.lane.b32.xlu0 %v288, 80
    %v501 = vpop.permute.xlu0 %500
    %v502 = vsel %vm301, %v495, 0
    %v504 = vsel %vm301, %v497, 0
    %v506 = vsel %vm301, %v499, 0
    %v508 = vsel %vm301, %v501, 0
    %510 = vmatprep.subr.mxu0 0.0
    %511 = vmatpush1.xpose.msra.mxu0 0.0
    %512 = vmatprep.subr.mxu0 0.0
    %513 = vmatpush1.xpose.msra.mxu0 0.0
    %514 = vmatprep.subr.mxu0 0.0
    %515 = vmatpush1.xpose.msra.mxu0 0.0
    %516 = vmatprep.subr.mxu0 0.0
    %517 = vmatpush1.xpose.msra.mxu0 0.0
    %518 = vmatprep.subr.mxu0 0.0
    %519 = vmatpush1.xpose.msra.mxu0 0.0
    %520 = vmatprep.subr.mxu0 0.0
    %521 = vmatpush1.xpose.msra.mxu0 0.0
    %522 = vmatprep.subr.mxu0 0.0
    %523 = vmatpush1.xpose.msra.mxu0 0.0
    %524 = vmatprep.subr.mxu0 0.0
    %525 = vmatpush1.xpose.msra.mxu0 0.0
    %526 = vmatprep.subr.mxu0 0.0
    %527 = vmatpush1.xpose.msra.mxu0 0.0
    %528 = vmatprep.subr.mxu0 0.0
    %529 = vmatpush1.xpose.msra.mxu0 0.0
    %530 = vmatprep.subr.mxu0 0.0
    %531 = vmatpush1.xpose.msra.mxu0 0.0
    %532 = vmatprep.subr.mxu0 0.0
    %533 = vmatpush1.xpose.msra.mxu0 0.0
    %534 = vmatprep.subr.mxu0 0.0
    %535 = vmatpush1.xpose.msra.mxu0 0.0
    %536 = vmatprep.subr.mxu0 0.0
    %537 = vmatpush1.xpose.msra.mxu0 0.0
    %538 = vmatprep.subr.mxu0 0.0
    %539 = vmatpush1.xpose.msra.mxu0 %v508
    %540 = vmatprep.subr.mxu0 0.0
    %541 = vmatpush1.xpose.msra.mxu0 %v506
    %542 = vmatprep.subr.mxu0 0.0
    %543 = vmatpush2.xpose.msra.mxu0 0.0
    %544 = vmatprep.subr.mxu0 0.0
    %545 = vmatpush2.xpose.msra.mxu0 0.0
    %546 = vmatprep.subr.mxu0 0.0
    %547 = vmatpush2.xpose.msra.mxu0 0.0
    %548 = vmatprep.subr.mxu0 0.0
    %549 = vmatpush2.xpose.msra.mxu0 0.0
    %550 = vmatprep.subr.mxu0 0.0
    %551 = vmatpush2.xpose.msra.mxu0 0.0
    %552 = vmatprep.subr.mxu0 0.0
    %553 = vmatpush2.xpose.msra.mxu0 0.0
    %554 = vmatprep.subr.mxu0 0.0
    %555 = vmatpush2.xpose.msra.mxu0 0.0
    %556 = vmatprep.subr.mxu0 0.0
    %557 = vmatpush2.xpose.msra.mxu0 0.0
    %558 = vmatprep.subr.mxu0 0.0
    %559 = vmatpush2.xpose.msra.mxu0 0.0
    %560 = vmatprep.subr.mxu0 0.0
    %561 = vmatpush2.xpose.msra.mxu0 0.0
    %562 = vmatprep.subr.mxu0 0.0
    %563 = vmatpush2.xpose.msra.mxu0 0.0
    %564 = vmatprep.subr.mxu0 0.0
    %565 = vmatpush2.xpose.msra.mxu0 0.0
    %566 = vmatprep.subr.mxu0 0.0
    %567 = vmatpush2.xpose.msra.mxu0 0.0
    %568 = vmatprep.subr.mxu0 0.0
    %569 = vmatpush2.xpose.msra.mxu0 0.0
    %570 = vmatprep.subr.mxu0 0.0
    %571 = vmatpush2.xpose.msra.mxu0 0.0
    %572 = vmatprep.subr.mxu0 0.0
    %573 = vmatpush2.xpose.msra.mxu0 0.0
    %574 = vmatprep.mubr.f32.mxu0 0.0
    %575 = vmatmul.mubr.f32.gmra.mxu0 %v502
    %v576 = vpop.f32.mrf.mxu0
    %v577 = vadd.f32 %v158, %v576
    %v578 = vpop.f32.mrf.mxu0
    %579 = vmatprep.mubr.f32.mxu0 0.0
    %580 = vmatmul.mubr.f32.gmra.mxu0 %v504
    %v581 = vpop.f32.mrf.mxu0
    %v582 = vadd.f32 %v159, %v581
    %v583 = vpop.f32.mrf.mxu0
    %584 = vdwg.mxu0
    %v585 = vsel %vm301, %v577, -inf
    %586 = vmax.xlane.f32.xlu0 %v585
    %v587 = vpop.xlane.xlu0 %586
    %v588 = vsel %vm301, %v582, -inf
    %589 = vmax.xlane.f32.xlu0 %v588
    %v590 = vpop.xlane.xlu0 %589
    %v591 = vsub.f32 %v577, %v587
    %v592 = vsub.f32 %v582, %v590
    %v593 = vmul.f32 %v591, 1.442695
    %v594 = vpow.pop %v593
    %v595 = vmul.f32 %v592, 1.442695
    %v596 = vpow.pop %v595
    %v597 = vsel %vm301, %v594, 0.0
    %598 = vadd.xlane.f32.xlu0 %v597
    %v599 = vpop.xlane.xlu0 %598
    %v600 = vsel %vm301, %v596, 0.0
    %601 = vadd.xlane.f32.xlu0 %v600
    %v602 = vpop.xlane.xlu0 %601
    %v603 = vrcp.pop %v599
    %v604 = vmul.f32 %v594, %v603
    %v605 = vrcp.pop %v602
    %v606 = vmul.f32 %v596, %v605
    %607 = vrot.lane.b32.xlu0 %v283, 48
    %v608 = vpop.permute.xlu0 %607
    %609 = vrot.lane.b32.xlu0 %v288, 48
    %v610 = vpop.permute.xlu0 %609
    %v614 = vsel %vm301, %v604, 0
    %v617 = vsel %vm301, %v606, 0
    %619 = vmatprep.subr.mxu0 0.0
    %620 = vmatpush1.msra.mxu0 0.0
    %621 = vmatprep.subr.mxu0 0.0
    %622 = vmatpush1.msra.mxu0 0.0
    %623 = vmatprep.subr.mxu0 0.0
    %624 = vmatpush1.msra.mxu0 0.0
    %625 = vmatprep.subr.mxu0 0.0
    %626 = vmatpush1.msra.mxu0 0.0
    %627 = vmatprep.subr.mxu0 0.0
    %628 = vmatpush1.msra.mxu0 0.0
    %629 = vmatprep.subr.mxu0 0.0
    %630 = vmatpush1.msra.mxu0 0.0
    %631 = vmatprep.subr.mxu0 0.0
    %632 = vmatpush1.msra.mxu0 0.0
    %633 = vmatprep.subr.mxu0 0.0
    %634 = vmatpush1.msra.mxu0 0.0
    %635 = vmatprep.subr.mxu0 0.0
    %636 = vmatpush1.msra.mxu0 0.0
    %637 = vmatprep.subr.mxu0 0.0
    %638 = vmatpush1.msra.mxu0 0.0
    %639 = vmatprep.subr.mxu0 0.0
    %640 = vmatpush1.msra.mxu0 0.0
    %641 = vmatprep.subr.mxu0 0.0
    %642 = vmatpush1.msra.mxu0 0.0
    %643 = vmatprep.subr.mxu0 0.0
    %644 = vmatpush1.msra.mxu0 0.0
    %645 = vmatprep.subr.mxu0 0.0
    %646 = vmatpush1.msra.mxu0 0.0
    %647 = vmatprep.subr.mxu0 0.0
    %648 = vmatpush1.msra.mxu0 %v610
    %649 = vmatprep.subr.mxu0 0.0
    %650 = vmatpush1.msra.mxu0 %v608
    %651 = vmatprep.subr.mxu0 0.0
    %652 = vmatpush2.msra.mxu0 0.0
    %653 = vmatprep.subr.mxu0 0.0
    %654 = vmatpush2.msra.mxu0 0.0
    %655 = vmatprep.subr.mxu0 0.0
    %656 = vmatpush2.msra.mxu0 0.0
    %657 = vmatprep.subr.mxu0 0.0
    %658 = vmatpush2.msra.mxu0 0.0
    %659 = vmatprep.subr.mxu0 0.0
    %660 = vmatpush2.msra.mxu0 0.0
    %661 = vmatprep.subr.mxu0 0.0
    %662 = vmatpush2.msra.mxu0 0.0
    %663 = vmatprep.subr.mxu0 0.0
    %664 = vmatpush2.msra.mxu0 0.0
    %665 = vmatprep.subr.mxu0 0.0
    %666 = vmatpush2.msra.mxu0 0.0
    %667 = vmatprep.subr.mxu0 0.0
    %668 = vmatpush2.msra.mxu0 0.0
    %669 = vmatprep.subr.mxu0 0.0
    %670 = vmatpush2.msra.mxu0 0.0
    %671 = vmatprep.subr.mxu0 0.0
    %672 = vmatpush2.msra.mxu0 0.0
    %673 = vmatprep.subr.mxu0 0.0
    %674 = vmatpush2.msra.mxu0 0.0
    %675 = vmatprep.subr.mxu0 0.0
    %676 = vmatpush2.msra.mxu0 0.0
    %677 = vmatprep.subr.mxu0 0.0
    %678 = vmatpush2.msra.mxu0 0.0
    %679 = vmatprep.subr.mxu0 0.0
    %680 = vmatpush2.msra.mxu0 0.0
    %681 = vmatprep.subr.mxu0 0.0
    %682 = vmatpush2.msra.mxu0 0.0
    %683 = vmatprep.mubr.f32.mxu0 0.0
    %684 = vmatmul.mubr.f32.gmra.mxu0 %v614
    %v685 = vpop.f32.mrf.mxu0
    %v686 = vadd.f32 0.0, %v685
    %v687 = vpop.f32.mrf.mxu0
    %688 = vmatprep.mubr.f32.mxu0 0.0
    %689 = vmatmul.mubr.f32.gmra.mxu0 %v617
    %v690 = vpop.f32.mrf.mxu0
    %v691 = vadd.f32 0.0, %v690
    %v692 = vpop.f32.mrf.mxu0
    %693 = vdwg.mxu0
    %v695 = vsel %vm301, %v686, 0
    %v698 = vsel %vm301, %v691, 0
    %700 = vmatprep.subr.mxu0 0.0
    %701 = vmatpush1.msra.mxu0 0.0
    %702 = vmatprep.subr.mxu0 0.0
    %703 = vmatpush1.msra.mxu0 0.0
    %704 = vmatprep.subr.mxu0 0.0
    %705 = vmatpush1.msra.mxu0 0.0
    %706 = vmatprep.subr.mxu0 0.0
    %707 = vmatpush1.msra.mxu0 0.0
    %708 = vmatprep.subr.mxu0 0.0
    %709 = vmatpush1.msra.mxu0 0.0
    %710 = vmatprep.subr.mxu0 0.0
    %711 = vmatpush1.msra.mxu0 0.0
    %712 = vmatprep.subr.mxu0 0.0
    %713 = vmatpush1.msra.mxu0 0.0
    %714 = vmatprep.subr.mxu0 0.0
    %715 = vmatpush1.msra.mxu0 0.0
    %716 = vmatprep.subr.mxu0 0.0
    %717 = vmatpush1.msra.mxu0 0.0
    %718 = vmatprep.subr.mxu0 0.0
    %719 = vmatpush1.msra.mxu0 0.0
    %720 = vmatprep.subr.mxu0 0.0
    %721 = vmatpush1.msra.mxu0 0.0
    %722 = vmatprep.subr.mxu0 0.0
    %723 = vmatpush1.msra.mxu0 0.0
    %724 = vmatprep.subr.mxu0 0.0
    %725 = vmatpush1.msra.mxu0 0.0
    %726 = vmatprep.subr.mxu0 0.0
    %727 = vmatpush1.msra.mxu0 0.0
    %728 = vmatprep.subr.mxu0 0.0
    %729 = vmatpush1.msra.mxu0 %v294
    %730 = vmatprep.subr.mxu0 0.0
    %731 = vmatpush1.msra.mxu0 %v293
    %732 = vmatprep.subr.mxu0 0.0
    %733 = vmatpush2.msra.mxu0 0.0
    %734 = vmatprep.subr.mxu0 0.0
    %735 = vmatpush2.msra.mxu0 0.0
    %736 = vmatprep.subr.mxu0 0.0
    %737 = vmatpush2.msra.mxu0 0.0
    %738 = vmatprep.subr.mxu0 0.0
    %739 = vmatpush2.msra.mxu0 0.0
    %740 = vmatprep.subr.mxu0 0.0
    %741 = vmatpush2.msra.mxu0 0.0
    %742 = vmatprep.subr.mxu0 0.0
    %743 = vmatpush2.msra.mxu0 0.0
    %744 = vmatprep.subr.mxu0 0.0
    %745 = vmatpush2.msra.mxu0 0.0
    %746 = vmatprep.subr.mxu0 0.0
    %747 = vmatpush2.msra.mxu0 0.0
    %748 = vmatprep.subr.mxu0 0.0
    %749 = vmatpush2.msra.mxu0 0.0
    %750 = vmatprep.subr.mxu0 0.0
    %751 = vmatpush2.msra.mxu0 0.0
    %752 = vmatprep.subr.mxu0 0.0
    %753 = vmatpush2.msra.mxu0 0.0
    %754 = vmatprep.subr.mxu0 0.0
    %755 = vmatpush2.msra.mxu0 0.0
    %756 = vmatprep.subr.mxu0 0.0
    %757 = vmatpush2.msra.mxu0 0.0
    %758 = vmatprep.subr.mxu0 0.0
    %759 = vmatpush2.msra.mxu0 0.0
    %760 = vmatprep.subr.mxu0 0.0
    %761 = vmatpush2.msra.mxu0 0.0
    %762 = vmatprep.subr.mxu0 0.0
    %763 = vmatpush2.msra.mxu0 0.0
    %764 = vmatprep.mubr.f32.mxu0 0.0
    %765 = vmatmul.mubr.f32.gmra.mxu0 %v695
    %v766 = vpop.f32.mrf.mxu0
    %v767 = vadd.f32 0.0, %v766
    %v768 = vpop.f32.mrf.mxu0
    %769 = vmatprep.mubr.f32.mxu0 0.0
    %770 = vmatmul.mubr.f32.gmra.mxu0 %v698
    %v771 = vpop.f32.mrf.mxu0
    %v772 = vadd.f32 0.0, %v771
    %v773 = vpop.f32.mrf.mxu0
    %774 = vdwg.mxu0
    %v776 = vsel %vm301, %v486, 0
    %v779 = vsel %vm301, %v491, 0
    %781 = vmatprep.subr.mxu0 0.0
    %782 = vmatpush1.msra.mxu0 0.0
    %783 = vmatprep.subr.mxu0 0.0
    %784 = vmatpush1.msra.mxu0 0.0
    %785 = vmatprep.subr.mxu0 0.0
    %786 = vmatpush1.msra.mxu0 0.0
    %787 = vmatprep.subr.mxu0 0.0
    %788 = vmatpush1.msra.mxu0 0.0
    %789 = vmatprep.subr.mxu0 0.0
    %790 = vmatpush1.msra.mxu0 0.0
    %791 = vmatprep.subr.mxu0 0.0
    %792 = vmatpush1.msra.mxu0 0.0
    %793 = vmatprep.subr.mxu0 0.0
    %794 = vmatpush1.msra.mxu0 0.0
    %795 = vmatprep.subr.mxu0 0.0
    %796 = vmatpush1.msra.mxu0 0.0
    %797 = vmatprep.subr.mxu0 0.0
    %798 = vmatpush1.msra.mxu0 0.0
    %799 = vmatprep.subr.mxu0 0.0
    %800 = vmatpush1.msra.mxu0 0.0
    %801 = vmatprep.subr.mxu0 0.0
    %802 = vmatpush1.msra.mxu0 0.0
    %803 = vmatprep.subr.mxu0 0.0
    %804 = vmatpush1.msra.mxu0 0.0
    %805 = vmatprep.subr.mxu0 0.0
    %806 = vmatpush1.msra.mxu0 0.0
    %807 = vmatprep.subr.mxu0 0.0
    %808 = vmatpush1.msra.mxu0 0.0
    %809 = vmatprep.subr.mxu0 0.0
    %810 = vmatpush1.msra.mxu0 %v292
    %811 = vmatprep.subr.mxu0 0.0
    %812 = vmatpush1.msra.mxu0 %v291
    %813 = vmatprep.subr.mxu0 0.0
    %814 = vmatpush2.msra.mxu0 0.0
    %815 = vmatprep.subr.mxu0 0.0
    %816 = vmatpush2.msra.mxu0 0.0
    %817 = vmatprep.subr.mxu0 0.0
    %818 = vmatpush2.msra.mxu0 0.0
    %819 = vmatprep.subr.mxu0 0.0
    %820 = vmatpush2.msra.mxu0 0.0
    %821 = vmatprep.subr.mxu0 0.0
    %822 = vmatpush2.msra.mxu0 0.0
    %823 = vmatprep.subr.mxu0 0.0
    %824 = vmatpush2.msra.mxu0 0.0
    %825 = vmatprep.subr.mxu0 0.0
    %826 = vmatpush2.msra.mxu0 0.0
    %827 = vmatprep.subr.mxu0 0.0
    %828 = vmatpush2.msra.mxu0 0.0
    %829 = vmatprep.subr.mxu0 0.0
    %830 = vmatpush2.msra.mxu0 0.0
    %831 = vmatprep.subr.mxu0 0.0
    %832 = vmatpush2.msra.mxu0 0.0
    %833 = vmatprep.subr.mxu0 0.0
    %834 = vmatpush2.msra.mxu0 0.0
    %835 = vmatprep.subr.mxu0 0.0
    %836 = vmatpush2.msra.mxu0 0.0
    %837 = vmatprep.subr.mxu0 0.0
    %838 = vmatpush2.msra.mxu0 0.0
    %839 = vmatprep.subr.mxu0 0.0
    %840 = vmatpush2.msra.mxu0 0.0
    %841 = vmatprep.subr.mxu0 0.0
    %842 = vmatpush2.msra.mxu0 0.0
    %843 = vmatprep.subr.mxu0 0.0
    %844 = vmatpush2.msra.mxu0 0.0
    %845 = vmatprep.mubr.f32.mxu0 0.0
    %846 = vmatmul.mubr.f32.gmra.mxu0 %v776
    %v847 = vpop.f32.mrf.mxu0
    %v848 = vadd.f32 %v767, %v847
    %v849 = vpop.f32.mrf.mxu0
    %850 = vmatprep.mubr.f32.mxu0 0.0
    %851 = vmatmul.mubr.f32.gmra.mxu0 %v779
    %v852 = vpop.f32.mrf.mxu0
    %v853 = vadd.f32 %v772, %v852
    %v854 = vpop.f32.mrf.mxu0
    %855 = vdwg.mxu0
    %v856 = vadd.f32 %v138, %v848
    %v857 = vadd.f32 %v143, %v853
    %v858 = vlaneseq
    %v859 = vshrl.u32 %v858, 7
    %v860 = vsub.s32 4, %v859
    %v861 = vrot.slane %v160, %v860
    %v862 = vadd.f32 %v856, %v861
    %v863 = vadd.f32 %v857, %v861
    %v864 = vsel %vm162, %v862, 0.0
    %865 = vadd.xlane.f32.xlu0 %v864
    %v866 = vpop.xlane.xlu0 %865
    %v867 = vsel %vm162, %v863, 0.0
    %868 = vadd.xlane.f32.xlu0 %v867
    %v869 = vpop.xlane.xlu0 %868
    %v870 = vmul.f32 %v866, %v169
    %v871 = vmul.f32 %v869, %v169
    %v872 = vsub.f32 %v862, %v870
    %v873 = vsub.f32 %v863, %v871
    %v874 = vmul.f32 %v872, %v872
    %v875 = vmul.f32 %v873, %v873
    %v876 = vsel %vm162, %v874, 0.0
    %877 = vadd.xlane.f32.xlu0 %v876
    %v878 = vpop.xlane.xlu0 %877
    %v879 = vsel %vm162, %v875, 0.0
    %880 = vadd.xlane.f32.xlu0 %v879
    %v881 = vpop.xlane.xlu0 %880
    %v882 = vmul.f32 %v878, %v169
    %v883 = vmul.f32 %v881, %v169
    %v884 = vadd.f32 %v882, 1e-05
    %v885 = vadd.f32 %v883, 1e-05
    %v886 = vrsqrt.pop %v884
    %v887 = vrsqrt.pop %v885
    %v888 = vmul.f32 %v872, %v886
    %v889 = vmul.f32 %v873, %v887
    %v890 = vlaneseq
    %v891 = vshrl.u32 %v890, 7
    %v892 = vsub.s32 2, %v891
    %v893 = vrot.slane %v160, %v892
    %v894 = vmul.f32 %v888, %v893
    %v895 = vmul.f32 %v889, %v893
    %v896 = vlaneseq
    %v897 = vshrl.u32 %v896, 7
    %v898 = vsub.s32 3, %v897
    %v899 = vrot.slane %v160, %v898
    %v900 = vadd.f32 %v894, %v899
    %v901 = vadd.f32 %v895, %v899
    %v902 = vld [vmem:[%s7] sm:$0xff]
    %v903 = vld [vmem:[%s7 + $0x8] sm:$0xff]
    %v904 = vld [vmem:[%s7 + $0x10] sm:$0xff]
    %v905 = vld [vmem:[%s7 + $0x18] sm:$0xff]
    %v906 = vlaneseq
    %v907 = vshrl.u32 %v906, 7
    %v908 = vsub.s32 1, %v907
    %v909 = vrot.slane %v161, %v908
    %v911 = vsel %vm162, %v900, 0
    %v914 = vsel %vm162, %v901, 0
    %916 = vmatprep.subr.mxu0 0.0
    %917 = vmatpush1.msra.mxu0 0.0
    %918 = vmatprep.subr.mxu0 0.0
    %919 = vmatpush1.msra.mxu0 0.0
    %920 = vmatprep.subr.mxu0 0.0
    %921 = vmatpush1.msra.mxu0 0.0
    %922 = vmatprep.subr.mxu0 0.0
    %923 = vmatpush1.msra.mxu0 0.0
    %924 = vmatprep.subr.mxu0 0.0
    %925 = vmatpush1.msra.mxu0 0.0
    %926 = vmatprep.subr.mxu0 0.0
    %927 = vmatpush1.msra.mxu0 0.0
    %928 = vmatprep.subr.mxu0 0.0
    %929 = vmatpush1.msra.mxu0 0.0
    %930 = vmatprep.subr.mxu0 0.0
    %931 = vmatpush1.msra.mxu0 0.0
    %932 = vmatprep.subr.mxu0 0.0
    %933 = vmatpush1.msra.mxu0 0.0
    %934 = vmatprep.subr.mxu0 0.0
    %935 = vmatpush1.msra.mxu0 0.0
    %936 = vmatprep.subr.mxu0 0.0
    %937 = vmatpush1.msra.mxu0 0.0
    %938 = vmatprep.subr.mxu0 0.0
    %939 = vmatpush1.msra.mxu0 0.0
    %940 = vmatprep.subr.mxu0 0.0
    %941 = vmatpush1.msra.mxu0 %v905
    %942 = vmatprep.subr.mxu0 0.0
    %943 = vmatpush1.msra.mxu0 %v904
    %944 = vmatprep.subr.mxu0 0.0
    %945 = vmatpush1.msra.mxu0 %v903
    %946 = vmatprep.subr.mxu0 0.0
    %947 = vmatpush1.msra.mxu0 %v902
    %948 = vmatprep.subr.mxu0 0.0
    %949 = vmatpush2.msra.mxu0 0.0
    %950 = vmatprep.subr.mxu0 0.0
    %951 = vmatpush2.msra.mxu0 0.0
    %952 = vmatprep.subr.mxu0 0.0
    %953 = vmatpush2.msra.mxu0 0.0
    %954 = vmatprep.subr.mxu0 0.0
    %955 = vmatpush2.msra.mxu0 0.0
    %956 = vmatprep.subr.mxu0 0.0
    %957 = vmatpush2.msra.mxu0 0.0
    %958 = vmatprep.subr.mxu0 0.0
    %959 = vmatpush2.msra.mxu0 0.0
    %960 = vmatprep.subr.mxu0 0.0
    %961 = vmatpush2.msra.mxu0 0.0
    %962 = vmatprep.subr.mxu0 0.0
    %963 = vmatpush2.msra.mxu0 0.0
    %964 = vmatprep.subr.mxu0 0.0
    %965 = vmatpush2.msra.mxu0 0.0
    %966 = vmatprep.subr.mxu0 0.0
    %967 = vmatpush2.msra.mxu0 0.0
    %968 = vmatprep.subr.mxu0 0.0
    %969 = vmatpush2.msra.mxu0 0.0
    %970 = vmatprep.subr.mxu0 0.0
    %971 = vmatpush2.msra.mxu0 0.0
    %972 = vmatprep.subr.mxu0 0.0
    %973 = vmatpush2.msra.mxu0 0.0
    %974 = vmatprep.subr.mxu0 0.0
    %975 = vmatpush2.msra.mxu0 0.0
    %976 = vmatprep.subr.mxu0 0.0
    %977 = vmatpush2.msra.mxu0 0.0
    %978 = vmatprep.subr.mxu0 0.0
    %979 = vmatpush2.msra.mxu0 0.0
    %980 = vmatprep.mubr.f32.mxu0 0.0
    %981 = vmatmul.mubr.f32.gmra.mxu0 %v911
    %v982 = vpop.f32.mrf.mxu0
    %v983 = vadd.f32 %v909, %v982
    %v984 = vpop.f32.mrf.mxu0
    %985 = vmatprep.mubr.f32.mxu0 0.0
    %986 = vmatmul.mubr.f32.gmra.mxu0 %v914
    %v987 = vpop.f32.mrf.mxu0
    %v988 = vadd.f32 %v909, %v987
    %v989 = vpop.f32.mrf.mxu0
    %990 = vdwg.mxu0
    %v991 = vmul.f32 %v983, 0.5
    %v992 = vmul.f32 %v988, 0.5
    %v993 = vmul.f32 %v983, 0.70710677
    %v994 = vmul.f32 %v988, 0.70710677
    %v995 = verf.f32.pop %v993
    %v996 = verf.f32.pop %v994
    %v997 = vadd.f32 %v995, 1.0
    %v998 = vadd.f32 %v996, 1.0
    %v999 = vmul.f32 %v991, %v997
    %v1000 = vmul.f32 %v992, %v998
    %v1001 = vld [vmem:[%s8] sm:$0xff]
    %v1002 = vld [vmem:[%s8 + $0x8] sm:$0xff]
    %v1003 = vld [vmem:[%s8 + $0x10] sm:$0xff]
    %v1004 = vld [vmem:[%s8 + $0x18] sm:$0xff]
    %v1005 = vld [vmem:[%s8 + $0x20] sm:$0xff]
    %v1006 = vld [vmem:[%s8 + $0x28] sm:$0xff]
    %v1007 = vld [vmem:[%s8 + $0x30] sm:$0xff]
    %v1008 = vld [vmem:[%s8 + $0x38] sm:$0xff]
    %v1009 = vld [vmem:[%s8 + $0x40] sm:$0xff]
    %v1010 = vld [vmem:[%s8 + $0x48] sm:$0xff]
    %v1011 = vld [vmem:[%s8 + $0x50] sm:$0xff]
    %v1012 = vld [vmem:[%s8 + $0x58] sm:$0xff]
    %v1013 = vld [vmem:[%s8 + $0x60] sm:$0xff]
    %v1014 = vld [vmem:[%s8 + $0x68] sm:$0xff]
    %v1015 = vld [vmem:[%s8 + $0x70] sm:$0xff]
    %v1016 = vld [vmem:[%s8 + $0x78] sm:$0xff]
    %v1017 = vlaneseq
    %v1018 = vshrl.u32 %v1017, 7
    %v1019 = vsub.s32 5, %v1018
    %v1020 = vrot.slane %v160, %v1019
    %1021 = vmatprep.subr.mxu0 0.0
    %1022 = vmatpush1.msra.mxu0 %v1016
    %1023 = vmatprep.subr.mxu0 0.0
    %1024 = vmatpush1.msra.mxu0 %v1015
    %1025 = vmatprep.subr.mxu0 0.0
    %1026 = vmatpush1.msra.mxu0 %v1014
    %1027 = vmatprep.subr.mxu0 0.0
    %1028 = vmatpush1.msra.mxu0 %v1013
    %1029 = vmatprep.subr.mxu0 0.0
    %1030 = vmatpush1.msra.mxu0 %v1012
    %1031 = vmatprep.subr.mxu0 0.0
    %1032 = vmatpush1.msra.mxu0 %v1011
    %1033 = vmatprep.subr.mxu0 0.0
    %1034 = vmatpush1.msra.mxu0 %v1010
    %1035 = vmatprep.subr.mxu0 0.0
    %1036 = vmatpush1.msra.mxu0 %v1009
    %1037 = vmatprep.subr.mxu0 0.0
    %1038 = vmatpush1.msra.mxu0 %v1008
    %1039 = vmatprep.subr.mxu0 0.0
    %1040 = vmatpush1.msra.mxu0 %v1007
    %1041 = vmatprep.subr.mxu0 0.0
    %1042 = vmatpush1.msra.mxu0 %v1006
    %1043 = vmatprep.subr.mxu0 0.0
    %1044 = vmatpush1.msra.mxu0 %v1005
    %1045 = vmatprep.subr.mxu0 0.0
    %1046 = vmatpush1.msra.mxu0 %v1004
    %1047 = vmatprep.subr.mxu0 0.0
    %1048 = vmatpush1.msra.mxu0 %v1003
    %1049 = vmatprep.subr.mxu0 0.0
    %1050 = vmatpush1.msra.mxu0 %v1002
    %1051 = vmatprep.subr.mxu0 0.0
    %1052 = vmatpush1.msra.mxu0 %v1001
    %1053 = vmatprep.subr.mxu0 0.0
    %1054 = vmatpush2.msra.mxu0 0.0
    %1055 = vmatprep.subr.mxu0 0.0
    %1056 = vmatpush2.msra.mxu0 0.0
    %1057 = vmatprep.subr.mxu0 0.0
    %1058 = vmatpush2.msra.mxu0 0.0
    %1059 = vmatprep.subr.mxu0 0.0
    %1060 = vmatpush2.msra.mxu0 0.0
    %1061 = vmatprep.subr.mxu0 0.0
    %1062 = vmatpush2.msra.mxu0 0.0
    %1063 = vmatprep.subr.mxu0 0.0
    %1064 = vmatpush2.msra.mxu0 0.0
    %1065 = vmatprep.subr.mxu0 0.0
    %1066 = vmatpush2.msra.mxu0 0.0
    %1067 = vmatprep.subr.mxu0 0.0
    %1068 = vmatpush2.msra.mxu0 0.0
    %1069 = vmatprep.subr.mxu0 0.0
    %1070 = vmatpush2.msra.mxu0 0.0
    %1071 = vmatprep.subr.mxu0 0.0
    %1072 = vmatpush2.msra.mxu0 0.0
    %1073 = vmatprep.subr.mxu0 0.0
    %1074 = vmatpush2.msra.mxu0 0.0
    %1075 = vmatprep.subr.mxu0 0.0
    %1076 = vmatpush2.msra.mxu0 0.0
    %1077 = vmatprep.subr.mxu0 0.0
    %1078 = vmatpush2.msra.mxu0 0.0
    %1079 = vmatprep.subr.mxu0 0.0
    %1080 = vmatpush2.msra.mxu0 0.0
    %1081 = vmatprep.subr.mxu0 0.0
    %1082 = vmatpush2.msra.mxu0 0.0
    %1083 = vmatprep.subr.mxu0 0.0
    %1084 = vmatpush2.msra.mxu0 0.0
    %1085 = vmatprep.mubr.f32.mxu0 0.0
    %1086 = vmatmul.mubr.f32.gmra.mxu0 %v999
    %v1087 = vpop.f32.mrf.mxu0
    %v1088 = vadd.f32 %v1020, %v1087
    %v1089 = vpop.f32.mrf.mxu0
    %1090 = vmatprep.mubr.f32.mxu0 0.0
    %1091 = vmatmul.mubr.f32.gmra.mxu0 %v1000
    %v1092 = vpop.f32.mrf.mxu0
    %v1093 = vadd.f32 %v1020, %v1092
    %v1094 = vpop.f32.mrf.mxu0
    %1095 = vdwg.mxu0
    %v1096 = vadd.f32 %v862, %v1088
    %v1097 = vadd.f32 %v863, %v1093
    %s1098 = scalar_lea.vmem %s3, 8
    %v1099 = vld [vmem:[%s1098] sm:$0x3f]
    %s1100 = scalar_lea.vmem %s4, 2
    %v1101 = vld [vmem:[%s1100] sm:$0x3]
    %v1102 = vsel %vm162, %v1096, 0.0
    %1103 = vadd.xlane.f32.xlu0 %v1102
    %v1104 = vpop.xlane.xlu0 %1103
    %v1105 = vsel %vm162, %v1097, 0.0
    %1106 = vadd.xlane.f32.xlu0 %v1105
    %v1107 = vpop.xlane.xlu0 %1106
    %v1108 = vmul.f32 %v1104, %v169
    %v1109 = vmul.f32 %v1107, %v169
    %v1110 = vsub.f32 %v1096, %v1108
    %v1111 = vsub.f32 %v1097, %v1109
    %v1112 = vmul.f32 %v1110, %v1110
    %v1113 = vmul.f32 %v1111, %v1111
    %v1114 = vsel %vm162, %v1112, 0.0
    %1115 = vadd.xlane.f32.xlu0 %v1114
    %v1116 = vpop.xlane.xlu0 %1115
    %v1117 = vsel %vm162, %v1113, 0.0
    %1118 = vadd.xlane.f32.xlu0 %v1117
    %v1119 = vpop.xlane.xlu0 %1118
    %v1120 = vmul.f32 %v1116, %v169
    %v1121 = vmul.f32 %v1119, %v169
    %v1122 = vadd.f32 %v1120, 1e-05
    %v1123 = vadd.f32 %v1121, 1e-05
    %v1124 = vrsqrt.pop %v1122
    %v1125 = vrsqrt.pop %v1123
    %v1126 = vmul.f32 %v1110, %v1124
    %v1127 = vmul.f32 %v1111, %v1125
    %v1128 = vlaneseq
    %v1129 = vshrl.u32 %v1128, 7
    %v1130 = vsub.s32 0, %v1129
    %v1131 = vrot.slane %v1099, %v1130
    %v1132 = vmul.f32 %v1126, %v1131
    %v1133 = vmul.f32 %v1127, %v1131
    %v1134 = vlaneseq
    %v1135 = vshrl.u32 %v1134, 7
    %v1136 = vsub.s32 1, %v1135
    %v1137 = vrot.slane %v1099, %v1136
    %v1138 = vadd.f32 %v1132, %v1137
    %v1139 = vadd.f32 %v1133, %v1137
    %s1140 = scalar_lea.vmem %s5, 32
    %v1141 = vld [vmem:[%s1140] sm:$0xff]
    %v1142 = vld [vmem:[%s1140 + $0x8] sm:$0xff]
    %v1143 = vld [vmem:[%s1140 + $0x10] sm:$0xff]
    %v1144 = vld [vmem:[%s1140 + $0x18] sm:$0xff]
    %v1145 = vlaneseq
    %v1146 = vshrl.u32 %v1145, 7
    %v1147 = vsub.s32 0, %v1146
    %v1148 = vrot.slane %v1101, %v1147
    %v1150 = vsel %vm162, %v1138, 0
    %v1153 = vsel %vm162, %v1139, 0
    %1155 = vmatprep.subr.mxu0 0.0
    %1156 = vmatpush1.msra.mxu0 0.0
    %1157 = vmatprep.subr.mxu0 0.0
    %1158 = vmatpush1.msra.mxu0 0.0
    %1159 = vmatprep.subr.mxu0 0.0
    %1160 = vmatpush1.msra.mxu0 0.0
    %1161 = vmatprep.subr.mxu0 0.0
    %1162 = vmatpush1.msra.mxu0 0.0
    %1163 = vmatprep.subr.mxu0 0.0
    %1164 = vmatpush1.msra.mxu0 0.0
    %1165 = vmatprep.subr.mxu0 0.0
    %1166 = vmatpush1.msra.mxu0 0.0
    %1167 = vmatprep.subr.mxu0 0.0
    %1168 = vmatpush1.msra.mxu0 0.0
    %1169 = vmatprep.subr.mxu0 0.0
    %1170 = vmatpush1.msra.mxu0 0.0
    %1171 = vmatprep.subr.mxu0 0.0
    %1172 = vmatpush1.msra.mxu0 0.0
    %1173 = vmatprep.subr.mxu0 0.0
    %1174 = vmatpush1.msra.mxu0 0.0
    %1175 = vmatprep.subr.mxu0 0.0
    %1176 = vmatpush1.msra.mxu0 0.0
    %1177 = vmatprep.subr.mxu0 0.0
    %1178 = vmatpush1.msra.mxu0 0.0
    %1179 = vmatprep.subr.mxu0 0.0
    %1180 = vmatpush1.msra.mxu0 %v1144
    %1181 = vmatprep.subr.mxu0 0.0
    %1182 = vmatpush1.msra.mxu0 %v1143
    %1183 = vmatprep.subr.mxu0 0.0
    %1184 = vmatpush1.msra.mxu0 %v1142
    %1185 = vmatprep.subr.mxu0 0.0
    %1186 = vmatpush1.msra.mxu0 %v1141
    %1187 = vmatprep.subr.mxu0 0.0
    %1188 = vmatpush2.msra.mxu0 0.0
    %1189 = vmatprep.subr.mxu0 0.0
    %1190 = vmatpush2.msra.mxu0 0.0
    %1191 = vmatprep.subr.mxu0 0.0
    %1192 = vmatpush2.msra.mxu0 0.0
    %1193 = vmatprep.subr.mxu0 0.0
    %1194 = vmatpush2.msra.mxu0 0.0
    %1195 = vmatprep.subr.mxu0 0.0
    %1196 = vmatpush2.msra.mxu0 0.0
    %1197 = vmatprep.subr.mxu0 0.0
    %1198 = vmatpush2.msra.mxu0 0.0
    %1199 = vmatprep.subr.mxu0 0.0
    %1200 = vmatpush2.msra.mxu0 0.0
    %1201 = vmatprep.subr.mxu0 0.0
    %1202 = vmatpush2.msra.mxu0 0.0
    %1203 = vmatprep.subr.mxu0 0.0
    %1204 = vmatpush2.msra.mxu0 0.0
    %1205 = vmatprep.subr.mxu0 0.0
    %1206 = vmatpush2.msra.mxu0 0.0
    %1207 = vmatprep.subr.mxu0 0.0
    %1208 = vmatpush2.msra.mxu0 0.0
    %1209 = vmatprep.subr.mxu0 0.0
    %1210 = vmatpush2.msra.mxu0 0.0
    %1211 = vmatprep.subr.mxu0 0.0
    %1212 = vmatpush2.msra.mxu0 0.0
    %1213 = vmatprep.subr.mxu0 0.0
    %1214 = vmatpush2.msra.mxu0 0.0
    %1215 = vmatprep.subr.mxu0 0.0
    %1216 = vmatpush2.msra.mxu0 0.0
    %1217 = vmatprep.subr.mxu0 0.0
    %1218 = vmatpush2.msra.mxu0 0.0
    %1219 = vmatprep.mubr.f32.mxu0 0.0
    %1220 = vmatmul.mubr.f32.gmra.mxu0 %v1150
    %v1221 = vpop.f32.mrf.mxu0
    %v1222 = vadd.f32 %v1148, %v1221
    %v1223 = vpop.f32.mrf.mxu0
    %1224 = vmatprep.mubr.f32.mxu0 0.0
    %1225 = vmatmul.mubr.f32.gmra.mxu0 %v1153
    %v1226 = vpop.f32.mrf.mxu0
    %v1227 = vadd.f32 %v1148, %v1226
    %v1228 = vpop.f32.mrf.mxu0
    %1229 = vdwg.mxu0
    %s1230 = scalar_lea.vmem %s6, 32
    %v1231 = vld [vmem:[%s1230] sm:$0xff]
    %v1232 = vld [vmem:[%s1230 + $0x8] sm:$0xff]
    %v1233 = vld [vmem:[%s1230 + $0x10] sm:$0xff]
    %v1234 = vld [vmem:[%s1230 + $0x18] sm:$0xff]
    %1237 = vrot.lane.b32.xlu0 %v1222, 96
    %v1238 = vpop.permute.xlu0 %1237
    %1239 = vrot.lane.b32.xlu0 %v1227, 96
    %v1240 = vpop.permute.xlu0 %1239
    %v1241 = vsel %vm301, %v1222, 0
    %v1243 = vsel %vm301, %v1227, 0
    %v1245 = vsel %vm301, %v1238, 0
    %v1247 = vsel %vm301, %v1240, 0
    %1249 = vmatprep.subr.mxu0 0.0
    %1250 = vmatpush1.xpose.msra.mxu0 0.0
    %1251 = vmatprep.subr.mxu0 0.0
    %1252 = vmatpush1.xpose.msra.mxu0 0.0
    %1253 = vmatprep.subr.mxu0 0.0
    %1254 = vmatpush1.xpose.msra.mxu0 0.0
    %1255 = vmatprep.subr.mxu0 0.0
    %1256 = vmatpush1.xpose.msra.mxu0 0.0
    %1257 = vmatprep.subr.mxu0 0.0
    %1258 = vmatpush1.xpose.msra.mxu0 0.0
    %1259 = vmatprep.subr.mxu0 0.0
    %1260 = vmatpush1.xpose.msra.mxu0 0.0
    %1261 = vmatprep.subr.mxu0 0.0
    %1262 = vmatpush1.xpose.msra.mxu0 0.0
    %1263 = vmatprep.subr.mxu0 0.0
    %1264 = vmatpush1.xpose.msra.mxu0 0.0
    %1265 = vmatprep.subr.mxu0 0.0
    %1266 = vmatpush1.xpose.msra.mxu0 0.0
    %1267 = vmatprep.subr.mxu0 0.0
    %1268 = vmatpush1.xpose.msra.mxu0 0.0
    %1269 = vmatprep.subr.mxu0 0.0
    %1270 = vmatpush1.xpose.msra.mxu0 0.0
    %1271 = vmatprep.subr.mxu0 0.0
    %1272 = vmatpush1.xpose.msra.mxu0 0.0
    %1273 = vmatprep.subr.mxu0 0.0
    %1274 = vmatpush1.xpose.msra.mxu0 0.0
    %1275 = vmatprep.subr.mxu0 0.0
    %1276 = vmatpush1.xpose.msra.mxu0 0.0
    %1277 = vmatprep.subr.mxu0 0.0
    %1278 = vmatpush1.xpose.msra.mxu0 %v1247
    %1279 = vmatprep.subr.mxu0 0.0
    %1280 = vmatpush1.xpose.msra.mxu0 %v1245
    %1281 = vmatprep.subr.mxu0 0.0
    %1282 = vmatpush2.xpose.msra.mxu0 0.0
    %1283 = vmatprep.subr.mxu0 0.0
    %1284 = vmatpush2.xpose.msra.mxu0 0.0
    %1285 = vmatprep.subr.mxu0 0.0
    %1286 = vmatpush2.xpose.msra.mxu0 0.0
    %1287 = vmatprep.subr.mxu0 0.0
    %1288 = vmatpush2.xpose.msra.mxu0 0.0
    %1289 = vmatprep.subr.mxu0 0.0
    %1290 = vmatpush2.xpose.msra.mxu0 0.0
    %1291 = vmatprep.subr.mxu0 0.0
    %1292 = vmatpush2.xpose.msra.mxu0 0.0
    %1293 = vmatprep.subr.mxu0 0.0
    %1294 = vmatpush2.xpose.msra.mxu0 0.0
    %1295 = vmatprep.subr.mxu0 0.0
    %1296 = vmatpush2.xpose.msra.mxu0 0.0
    %1297 = vmatprep.subr.mxu0 0.0
    %1298 = vmatpush2.xpose.msra.mxu0 0.0
    %1299 = vmatprep.subr.mxu0 0.0
    %1300 = vmatpush2.xpose.msra.mxu0 0.0
    %1301 = vmatprep.subr.mxu0 0.0
    %1302 = vmatpush2.xpose.msra.mxu0 0.0
    %1303 = vmatprep.subr.mxu0 0.0
    %1304 = vmatpush2.xpose.msra.mxu0 0.0
    %1305 = vmatprep.subr.mxu0 0.0
    %1306 = vmatpush2.xpose.msra.mxu0 0.0
    %1307 = vmatprep.subr.mxu0 0.0
    %1308 = vmatpush2.xpose.msra.mxu0 0.0
    %1309 = vmatprep.subr.mxu0 0.0
    %1310 = vmatpush2.xpose.msra.mxu0 0.0
    %1311 = vmatprep.subr.mxu0 0.0
    %1312 = vmatpush2.xpose.msra.mxu0 0.0
    %1313 = vmatprep.mubr.f32.mxu0 0.0
    %1314 = vmatmul.mubr.f32.gmra.mxu0 %v1241
    %v1315 = vpop.f32.mrf.mxu0
    %v1316 = vadd.f32 %v158, %v1315
    %v1317 = vpop.f32.mrf.mxu0
    %1318 = vmatprep.mubr.f32.mxu0 0.0
    %1319 = vmatmul.mubr.f32.gmra.mxu0 %v1243
    %v1320 = vpop.f32.mrf.mxu0
    %v1321 = vadd.f32 %v159, %v1320
    %v1322 = vpop.f32.mrf.mxu0
    %1323 = vdwg.mxu0
    %v1324 = vsel %vm301, %v1316, -inf
    %1325 = vmax.xlane.f32.xlu0 %v1324
    %v1326 = vpop.xlane.xlu0 %1325
    %v1327 = vsel %vm301, %v1321, -inf
    %1328 = vmax.xlane.f32.xlu0 %v1327
    %v1329 = vpop.xlane.xlu0 %1328
    %v1330 = vsub.f32 %v1316, %v1326
    %v1331 = vsub.f32 %v1321, %v1329
    %v1332 = vmul.f32 %v1330, 1.442695
    %v1333 = vpow.pop %v1332
    %v1334 = vmul.f32 %v1331, 1.442695
    %v1335 = vpow.pop %v1334
    %v1336 = vsel %vm301, %v1333, 0.0
    %1337 = vadd.xlane.f32.xlu0 %v1336
    %v1338 = vpop.xlane.xlu0 %1337
    %v1339 = vsel %vm301, %v1335, 0.0
    %1340 = vadd.xlane.f32.xlu0 %v1339
    %v1341 = vpop.xlane.xlu0 %1340
    %v1342 = vrcp.pop %v1338
    %v1343 = vmul.f32 %v1333, %v1342
    %v1344 = vrcp.pop %v1341
    %v1345 = vmul.f32 %v1335, %v1344
    %1346 = vrot.lane.b32.xlu0 %v1222, 64
    %v1347 = vpop.permute.xlu0 %1346
    %1348 = vrot.lane.b32.xlu0 %v1227, 64
    %v1349 = vpop.permute.xlu0 %1348
    %v1353 = vsel %vm301, %v1343, 0
    %v1356 = vsel %vm301, %v1345, 0
    %1358 = vmatprep.subr.mxu0 0.0
    %1359 = vmatpush1.msra.mxu0 0.0
    %1360 = vmatprep.subr.mxu0 0.0
    %1361 = vmatpush1.msra.mxu0 0.0
    %1362 = vmatprep.subr.mxu0 0.0
    %1363 = vmatpush1.msra.mxu0 0.0
    %1364 = vmatprep.subr.mxu0 0.0
    %1365 = vmatpush1.msra.mxu0 0.0
    %1366 = vmatprep.subr.mxu0 0.0
    %1367 = vmatpush1.msra.mxu0 0.0
    %1368 = vmatprep.subr.mxu0 0.0
    %1369 = vmatpush1.msra.mxu0 0.0
    %1370 = vmatprep.subr.mxu0 0.0
    %1371 = vmatpush1.msra.mxu0 0.0
    %1372 = vmatprep.subr.mxu0 0.0
    %1373 = vmatpush1.msra.mxu0 0.0
    %1374 = vmatprep.subr.mxu0 0.0
    %1375 = vmatpush1.msra.mxu0 0.0
    %1376 = vmatprep.subr.mxu0 0.0
    %1377 = vmatpush1.msra.mxu0 0.0
    %1378 = vmatprep.subr.mxu0 0.0
    %1379 = vmatpush1.msra.mxu0 0.0
    %1380 = vmatprep.subr.mxu0 0.0
    %1381 = vmatpush1.msra.mxu0 0.0
    %1382 = vmatprep.subr.mxu0 0.0
    %1383 = vmatpush1.msra.mxu0 0.0
    %1384 = vmatprep.subr.mxu0 0.0
    %1385 = vmatpush1.msra.mxu0 0.0
    %1386 = vmatprep.subr.mxu0 0.0
    %1387 = vmatpush1.msra.mxu0 %v1349
    %1388 = vmatprep.subr.mxu0 0.0
    %1389 = vmatpush1.msra.mxu0 %v1347
    %1390 = vmatprep.subr.mxu0 0.0
    %1391 = vmatpush2.msra.mxu0 0.0
    %1392 = vmatprep.subr.mxu0 0.0
    %1393 = vmatpush2.msra.mxu0 0.0
    %1394 = vmatprep.subr.mxu0 0.0
    %1395 = vmatpush2.msra.mxu0 0.0
    %1396 = vmatprep.subr.mxu0 0.0
    %1397 = vmatpush2.msra.mxu0 0.0
    %1398 = vmatprep.subr.mxu0 0.0
    %1399 = vmatpush2.msra.mxu0 0.0
    %1400 = vmatprep.subr.mxu0 0.0
    %1401 = vmatpush2.msra.mxu0 0.0
    %1402 = vmatprep.subr.mxu0 0.0
    %1403 = vmatpush2.msra.mxu0 0.0
    %1404 = vmatprep.subr.mxu0 0.0
    %1405 = vmatpush2.msra.mxu0 0.0
    %1406 = vmatprep.subr.mxu0 0.0
    %1407 = vmatpush2.msra.mxu0 0.0
    %1408 = vmatprep.subr.mxu0 0.0
    %1409 = vmatpush2.msra.mxu0 0.0
    %1410 = vmatprep.subr.mxu0 0.0
    %1411 = vmatpush2.msra.mxu0 0.0
    %1412 = vmatprep.subr.mxu0 0.0
    %1413 = vmatpush2.msra.mxu0 0.0
    %1414 = vmatprep.subr.mxu0 0.0
    %1415 = vmatpush2.msra.mxu0 0.0
    %1416 = vmatprep.subr.mxu0 0.0
    %1417 = vmatpush2.msra.mxu0 0.0
    %1418 = vmatprep.subr.mxu0 0.0
    %1419 = vmatpush2.msra.mxu0 0.0
    %1420 = vmatprep.subr.mxu0 0.0
    %1421 = vmatpush2.msra.mxu0 0.0
    %1422 = vmatprep.mubr.f32.mxu0 0.0
    %1423 = vmatmul.mubr.f32.gmra.mxu0 %v1353
    %v1424 = vpop.f32.mrf.mxu0
    %v1425 = vadd.f32 0.0, %v1424
    %v1426 = vpop.f32.mrf.mxu0
    %1427 = vmatprep.mubr.f32.mxu0 0.0
    %1428 = vmatmul.mubr.f32.gmra.mxu0 %v1356
    %v1429 = vpop.f32.mrf.mxu0
    %v1430 = vadd.f32 0.0, %v1429
    %v1431 = vpop.f32.mrf.mxu0
    %1432 = vdwg.mxu0
    %1433 = vrot.lane.b32.xlu0 %v1222, 112
    %v1434 = vpop.permute.xlu0 %1433
    %1435 = vrot.lane.b32.xlu0 %v1227, 112
    %v1436 = vpop.permute.xlu0 %1435
    %1437 = vrot.lane.b32.xlu0 %v1222, 80
    %v1438 = vpop.permute.xlu0 %1437
    %1439 = vrot.lane.b32.xlu0 %v1227, 80
    %v1440 = vpop.permute.xlu0 %1439
    %v1441 = vsel %vm301, %v1434, 0
    %v1443 = vsel %vm301, %v1436, 0
    %v1445 = vsel %vm301, %v1438, 0
    %v1447 = vsel %vm301, %v1440, 0
    %1449 = vmatprep.subr.mxu0 0.0
    %1450 = vmatpush1.xpose.msra.mxu0 0.0
    %1451 = vmatprep.subr.mxu0 0.0
    %1452 = vmatpush1.xpose.msra.mxu0 0.0
    %1453 = vmatprep.subr.mxu0 0.0
    %1454 = vmatpush1.xpose.msra.mxu0 0.0
    %1455 = vmatprep.subr.mxu0 0.0
    %1456 = vmatpush1.xpose.msra.mxu0 0.0
    %1457 = vmatprep.subr.mxu0 0.0
    %1458 = vmatpush1.xpose.msra.mxu0 0.0
    %1459 = vmatprep.subr.mxu0 0.0
    %1460 = vmatpush1.xpose.msra.mxu0 0.0
    %1461 = vmatprep.subr.mxu0 0.0
    %1462 = vmatpush1.xpose.msra.mxu0 0.0
    %1463 = vmatprep.subr.mxu0 0.0
    %1464 = vmatpush1.xpose.msra.mxu0 0.0
    %1465 = vmatprep.subr.mxu0 0.0
    %1466 = vmatpush1.xpose.msra.mxu0 0.0
    %1467 = vmatprep.subr.mxu0 0.0
    %1468 = vmatpush1.xpose.msra.mxu0 0.0
    %1469 = vmatprep.subr.mxu0 0.0
    %1470 = vmatpush1.xpose.msra.mxu0 0.0
    %1471 = vmatprep.subr.mxu0 0.0
    %1472 = vmatpush1.xpose.msra.mxu0 0.0
    %1473 = vmatprep.subr.mxu0 0.0
    %1474 = vmatpush1.xpose.msra.mxu0 0.0
    %1475 = vmatprep.subr.mxu0 0.0
    %1476 = vmatpush1.xpose.msra.mxu0 0.0
    %1477 = vmatprep.subr.mxu0 0.0
    %1478 = vmatpush1.xpose.msra.mxu0 %v1447
    %1479 = vmatprep.subr.mxu0 0.0
    %1480 = vmatpush1.xpose.msra.mxu0 %v1445
    %1481 = vmatprep.subr.mxu0 0.0
    %1482 = vmatpush2.xpose.msra.mxu0 0.0
    %1483 = vmatprep.subr.mxu0 0.0
    %1484 = vmatpush2.xpose.msra.mxu0 0.0
    %1485 = vmatprep.subr.mxu0 0.0
    %1486 = vmatpush2.xpose.msra.mxu0 0.0
    %1487 = vmatprep.subr.mxu0 0.0
    %1488 = vmatpush2.xpose.msra.mxu0 0.0
    %1489 = vmatprep.subr.mxu0 0.0
    %1490 = vmatpush2.xpose.msra.mxu0 0.0
    %1491 = vmatprep.subr.mxu0 0.0
    %1492 = vmatpush2.xpose.msra.mxu0 0.0
    %1493 = vmatprep.subr.mxu0 0.0
    %1494 = vmatpush2.xpose.msra.mxu0 0.0
    %1495 = vmatprep.subr.mxu0 0.0
    %1496 = vmatpush2.xpose.msra.mxu0 0.0
    %1497 = vmatprep.subr.mxu0 0.0
    %1498 = vmatpush2.xpose.msra.mxu0 0.0
    %1499 = vmatprep.subr.mxu0 0.0
    %1500 = vmatpush2.xpose.msra.mxu0 0.0
    %1501 = vmatprep.subr.mxu0 0.0
    %1502 = vmatpush2.xpose.msra.mxu0 0.0
    %1503 = vmatprep.subr.mxu0 0.0
    %1504 = vmatpush2.xpose.msra.mxu0 0.0
    %1505 = vmatprep.subr.mxu0 0.0
    %1506 = vmatpush2.xpose.msra.mxu0 0.0
    %1507 = vmatprep.subr.mxu0 0.0
    %1508 = vmatpush2.xpose.msra.mxu0 0.0
    %1509 = vmatprep.subr.mxu0 0.0
    %1510 = vmatpush2.xpose.msra.mxu0 0.0
    %1511 = vmatprep.subr.mxu0 0.0
    %1512 = vmatpush2.xpose.msra.mxu0 0.0
    %1513 = vmatprep.mubr.f32.mxu0 0.0
    %1514 = vmatmul.mubr.f32.gmra.mxu0 %v1441
    %v1515 = vpop.f32.mrf.mxu0
    %v1516 = vadd.f32 %v158, %v1515
    %v1517 = vpop.f32.mrf.mxu0
    %1518 = vmatprep.mubr.f32.mxu0 0.0
    %1519 = vmatmul.mubr.f32.gmra.mxu0 %v1443
    %v1520 = vpop.f32.mrf.mxu0
    %v1521 = vadd.f32 %v159, %v1520
    %v1522 = vpop.f32.mrf.mxu0
    %1523 = vdwg.mxu0
    %v1524 = vsel %vm301, %v1516, -inf
    %1525 = vmax.xlane.f32.xlu0 %v1524
    %v1526 = vpop.xlane.xlu0 %1525
    %v1527 = vsel %vm301, %v1521, -inf
    %1528 = vmax.xlane.f32.xlu0 %v1527
    %v1529 = vpop.xlane.xlu0 %1528
    %v1530 = vsub.f32 %v1516, %v1526
    %v1531 = vsub.f32 %v1521, %v1529
    %v1532 = vmul.f32 %v1530, 1.442695
    %v1533 = vpow.pop %v1532
    %v1534 = vmul.f32 %v1531, 1.442695
    %v1535 = vpow.pop %v1534
    %v1536 = vsel %vm301, %v1533, 0.0
    %1537 = vadd.xlane.f32.xlu0 %v1536
    %v1538 = vpop.xlane.xlu0 %1537
    %v1539 = vsel %vm301, %v1535, 0.0
    %1540 = vadd.xlane.f32.xlu0 %v1539
    %v1541 = vpop.xlane.xlu0 %1540
    %v1542 = vrcp.pop %v1538
    %v1543 = vmul.f32 %v1533, %v1542
    %v1544 = vrcp.pop %v1541
    %v1545 = vmul.f32 %v1535, %v1544
    %1546 = vrot.lane.b32.xlu0 %v1222, 48
    %v1547 = vpop.permute.xlu0 %1546
    %1548 = vrot.lane.b32.xlu0 %v1227, 48
    %v1549 = vpop.permute.xlu0 %1548
    %v1553 = vsel %vm301, %v1543, 0
    %v1556 = vsel %vm301, %v1545, 0
    %1558 = vmatprep.subr.mxu0 0.0
    %1559 = vmatpush1.msra.mxu0 0.0
    %1560 = vmatprep.subr.mxu0 0.0
    %1561 = vmatpush1.msra.mxu0 0.0
    %1562 = vmatprep.subr.mxu0 0.0
    %1563 = vmatpush1.msra.mxu0 0.0
    %1564 = vmatprep.subr.mxu0 0.0
    %1565 = vmatpush1.msra.mxu0 0.0
    %1566 = vmatprep.subr.mxu0 0.0
    %1567 = vmatpush1.msra.mxu0 0.0
    %1568 = vmatprep.subr.mxu0 0.0
    %1569 = vmatpush1.msra.mxu0 0.0
    %1570 = vmatprep.subr.mxu0 0.0
    %1571 = vmatpush1.msra.mxu0 0.0
    %1572 = vmatprep.subr.mxu0 0.0
    %1573 = vmatpush1.msra.mxu0 0.0
    %1574 = vmatprep.subr.mxu0 0.0
    %1575 = vmatpush1.msra.mxu0 0.0
    %1576 = vmatprep.subr.mxu0 0.0
    %1577 = vmatpush1.msra.mxu0 0.0
    %1578 = vmatprep.subr.mxu0 0.0
    %1579 = vmatpush1.msra.mxu0 0.0
    %1580 = vmatprep.subr.mxu0 0.0
    %1581 = vmatpush1.msra.mxu0 0.0
    %1582 = vmatprep.subr.mxu0 0.0
    %1583 = vmatpush1.msra.mxu0 0.0
    %1584 = vmatprep.subr.mxu0 0.0
    %1585 = vmatpush1.msra.mxu0 0.0
    %1586 = vmatprep.subr.mxu0 0.0
    %1587 = vmatpush1.msra.mxu0 %v1549
    %1588 = vmatprep.subr.mxu0 0.0
    %1589 = vmatpush1.msra.mxu0 %v1547
    %1590 = vmatprep.subr.mxu0 0.0
    %1591 = vmatpush2.msra.mxu0 0.0
    %1592 = vmatprep.subr.mxu0 0.0
    %1593 = vmatpush2.msra.mxu0 0.0
    %1594 = vmatprep.subr.mxu0 0.0
    %1595 = vmatpush2.msra.mxu0 0.0
    %1596 = vmatprep.subr.mxu0 0.0
    %1597 = vmatpush2.msra.mxu0 0.0
    %1598 = vmatprep.subr.mxu0 0.0
    %1599 = vmatpush2.msra.mxu0 0.0
    %1600 = vmatprep.subr.mxu0 0.0
    %1601 = vmatpush2.msra.mxu0 0.0
    %1602 = vmatprep.subr.mxu0 0.0
    %1603 = vmatpush2.msra.mxu0 0.0
    %1604 = vmatprep.subr.mxu0 0.0
    %1605 = vmatpush2.msra.mxu0 0.0
    %1606 = vmatprep.subr.mxu0 0.0
    %1607 = vmatpush2.msra.mxu0 0.0
    %1608 = vmatprep.subr.mxu0 0.0
    %1609 = vmatpush2.msra.mxu0 0.0
    %1610 = vmatprep.subr.mxu0 0.0
    %1611 = vmatpush2.msra.mxu0 0.0
    %1612 = vmatprep.subr.mxu0 0.0
    %1613 = vmatpush2.msra.mxu0 0.0
    %1614 = vmatprep.subr.mxu0 0.0
    %1615 = vmatpush2.msra.mxu0 0.0
    %1616 = vmatprep.subr.mxu0 0.0
    %1617 = vmatpush2.msra.mxu0 0.0
    %1618 = vmatprep.subr.mxu0 0.0
    %1619 = vmatpush2.msra.mxu0 0.0
    %1620 = vmatprep.subr.mxu0 0.0
    %1621 = vmatpush2.msra.mxu0 0.0
    %1622 = vmatprep.mubr.f32.mxu0 0.0
    %1623 = vmatmul.mubr.f32.gmra.mxu0 %v1553
    %v1624 = vpop.f32.mrf.mxu0
    %v1625 = vadd.f32 0.0, %v1624
    %v1626 = vpop.f32.mrf.mxu0
    %1627 = vmatprep.mubr.f32.mxu0 0.0
    %1628 = vmatmul.mubr.f32.gmra.mxu0 %v1556
    %v1629 = vpop.f32.mrf.mxu0
    %v1630 = vadd.f32 0.0, %v1629
    %v1631 = vpop.f32.mrf.mxu0
    %1632 = vdwg.mxu0
    %v1634 = vsel %vm301, %v1625, 0
    %v1637 = vsel %vm301, %v1630, 0
    %1639 = vmatprep.subr.mxu0 0.0
    %1640 = vmatpush1.msra.mxu0 0.0
    %1641 = vmatprep.subr.mxu0 0.0
    %1642 = vmatpush1.msra.mxu0 0.0
    %1643 = vmatprep.subr.mxu0 0.0
    %1644 = vmatpush1.msra.mxu0 0.0
    %1645 = vmatprep.subr.mxu0 0.0
    %1646 = vmatpush1.msra.mxu0 0.0
    %1647 = vmatprep.subr.mxu0 0.0
    %1648 = vmatpush1.msra.mxu0 0.0
    %1649 = vmatprep.subr.mxu0 0.0
    %1650 = vmatpush1.msra.mxu0 0.0
    %1651 = vmatprep.subr.mxu0 0.0
    %1652 = vmatpush1.msra.mxu0 0.0
    %1653 = vmatprep.subr.mxu0 0.0
    %1654 = vmatpush1.msra.mxu0 0.0
    %1655 = vmatprep.subr.mxu0 0.0
    %1656 = vmatpush1.msra.mxu0 0.0
    %1657 = vmatprep.subr.mxu0 0.0
    %1658 = vmatpush1.msra.mxu0 0.0
    %1659 = vmatprep.subr.mxu0 0.0
    %1660 = vmatpush1.msra.mxu0 0.0
    %1661 = vmatprep.subr.mxu0 0.0
    %1662 = vmatpush1.msra.mxu0 0.0
    %1663 = vmatprep.subr.mxu0 0.0
    %1664 = vmatpush1.msra.mxu0 0.0
    %1665 = vmatprep.subr.mxu0 0.0
    %1666 = vmatpush1.msra.mxu0 0.0
    %1667 = vmatprep.subr.mxu0 0.0
    %1668 = vmatpush1.msra.mxu0 %v1234
    %1669 = vmatprep.subr.mxu0 0.0
    %1670 = vmatpush1.msra.mxu0 %v1233
    %1671 = vmatprep.subr.mxu0 0.0
    %1672 = vmatpush2.msra.mxu0 0.0
    %1673 = vmatprep.subr.mxu0 0.0
    %1674 = vmatpush2.msra.mxu0 0.0
    %1675 = vmatprep.subr.mxu0 0.0
    %1676 = vmatpush2.msra.mxu0 0.0
    %1677 = vmatprep.subr.mxu0 0.0
    %1678 = vmatpush2.msra.mxu0 0.0
    %1679 = vmatprep.subr.mxu0 0.0
    %1680 = vmatpush2.msra.mxu0 0.0
    %1681 = vmatprep.subr.mxu0 0.0
    %1682 = vmatpush2.msra.mxu0 0.0
    %1683 = vmatprep.subr.mxu0 0.0
    %1684 = vmatpush2.msra.mxu0 0.0
    %1685 = vmatprep.subr.mxu0 0.0
    %1686 = vmatpush2.msra.mxu0 0.0
    %1687 = vmatprep.subr.mxu0 0.0
    %1688 = vmatpush2.msra.mxu0 0.0
    %1689 = vmatprep.subr.mxu0 0.0
    %1690 = vmatpush2.msra.mxu0 0.0
    %1691 = vmatprep.subr.mxu0 0.0
    %1692 = vmatpush2.msra.mxu0 0.0
    %1693 = vmatprep.subr.mxu0 0.0
    %1694 = vmatpush2.msra.mxu0 0.0
    %1695 = vmatprep.subr.mxu0 0.0
    %1696 = vmatpush2.msra.mxu0 0.0
    %1697 = vmatprep.subr.mxu0 0.0
    %1698 = vmatpush2.msra.mxu0 0.0
    %1699 = vmatprep.subr.mxu0 0.0
    %1700 = vmatpush2.msra.mxu0 0.0
    %1701 = vmatprep.subr.mxu0 0.0
    %1702 = vmatpush2.msra.mxu0 0.0
    %1703 = vmatprep.mubr.f32.mxu0 0.0
    %1704 = vmatmul.mubr.f32.gmra.mxu0 %v1634
    %v1705 = vpop.f32.mrf.mxu0
    %v1706 = vadd.f32 0.0, %v1705
    %v1707 = vpop.f32.mrf.mxu0
    %1708 = vmatprep.mubr.f32.mxu0 0.0
    %1709 = vmatmul.mubr.f32.gmra.mxu0 %v1637
    %v1710 = vpop.f32.mrf.mxu0
    %v1711 = vadd.f32 0.0, %v1710
    %v1712 = vpop.f32.mrf.mxu0
    %1713 = vdwg.mxu0
    %v1715 = vsel %vm301, %v1425, 0
    %v1718 = vsel %vm301, %v1430, 0
    %1720 = vmatprep.subr.mxu0 0.0
    %1721 = vmatpush1.msra.mxu0 0.0
    %1722 = vmatprep.subr.mxu0 0.0
    %1723 = vmatpush1.msra.mxu0 0.0
    %1724 = vmatprep.subr.mxu0 0.0
    %1725 = vmatpush1.msra.mxu0 0.0
    %1726 = vmatprep.subr.mxu0 0.0
    %1727 = vmatpush1.msra.mxu0 0.0
    %1728 = vmatprep.subr.mxu0 0.0
    %1729 = vmatpush1.msra.mxu0 0.0
    %1730 = vmatprep.subr.mxu0 0.0
    %1731 = vmatpush1.msra.mxu0 0.0
    %1732 = vmatprep.subr.mxu0 0.0
    %1733 = vmatpush1.msra.mxu0 0.0
    %1734 = vmatprep.subr.mxu0 0.0
    %1735 = vmatpush1.msra.mxu0 0.0
    %1736 = vmatprep.subr.mxu0 0.0
    %1737 = vmatpush1.msra.mxu0 0.0
    %1738 = vmatprep.subr.mxu0 0.0
    %1739 = vmatpush1.msra.mxu0 0.0
    %1740 = vmatprep.subr.mxu0 0.0
    %1741 = vmatpush1.msra.mxu0 0.0
    %1742 = vmatprep.subr.mxu0 0.0
    %1743 = vmatpush1.msra.mxu0 0.0
    %1744 = vmatprep.subr.mxu0 0.0
    %1745 = vmatpush1.msra.mxu0 0.0
    %1746 = vmatprep.subr.mxu0 0.0
    %1747 = vmatpush1.msra.mxu0 0.0
    %1748 = vmatprep.subr.mxu0 0.0
    %1749 = vmatpush1.msra.mxu0 %v1232
    %1750 = vmatprep.subr.mxu0 0.0
    %1751 = vmatpush1.msra.mxu0 %v1231
    %1752 = vmatprep.subr.mxu0 0.0
    %1753 = vmatpush2.msra.mxu0 0.0
    %1754 = vmatprep.subr.mxu0 0.0
    %1755 = vmatpush2.msra.mxu0 0.0
    %1756 = vmatprep.subr.mxu0 0.0
    %1757 = vmatpush2.msra.mxu0 0.0
    %1758 = vmatprep.subr.mxu0 0.0
    %1759 = vmatpush2.msra.mxu0 0.0
    %1760 = vmatprep.subr.mxu0 0.0
    %1761 = vmatpush2.msra.mxu0 0.0
    %1762 = vmatprep.subr.mxu0 0.0
    %1763 = vmatpush2.msra.mxu0 0.0
    %1764 = vmatprep.subr.mxu0 0.0
    %1765 = vmatpush2.msra.mxu0 0.0
    %1766 = vmatprep.subr.mxu0 0.0
    %1767 = vmatpush2.msra.mxu0 0.0
    %1768 = vmatprep.subr.mxu0 0.0
    %1769 = vmatpush2.msra.mxu0 0.0
    %1770 = vmatprep.subr.mxu0 0.0
    %1771 = vmatpush2.msra.mxu0 0.0
    %1772 = vmatprep.subr.mxu0 0.0
    %1773 = vmatpush2.msra.mxu0 0.0
    %1774 = vmatprep.subr.mxu0 0.0
    %1775 = vmatpush2.msra.mxu0 0.0
    %1776 = vmatprep.subr.mxu0 0.0
    %1777 = vmatpush2.msra.mxu0 0.0
    %1778 = vmatprep.subr.mxu0 0.0
    %1779 = vmatpush2.msra.mxu0 0.0
    %1780 = vmatprep.subr.mxu0 0.0
    %1781 = vmatpush2.msra.mxu0 0.0
    %1782 = vmatprep.subr.mxu0 0.0
    %1783 = vmatpush2.msra.mxu0 0.0
    %1784 = vmatprep.mubr.f32.mxu0 0.0
    %1785 = vmatmul.mubr.f32.gmra.mxu0 %v1715
    %v1786 = vpop.f32.mrf.mxu0
    %v1787 = vadd.f32 %v1706, %v1786
    %v1788 = vpop.f32.mrf.mxu0
    %1789 = vmatprep.mubr.f32.mxu0 0.0
    %1790 = vmatmul.mubr.f32.gmra.mxu0 %v1718
    %v1791 = vpop.f32.mrf.mxu0
    %v1792 = vadd.f32 %v1711, %v1791
    %v1793 = vpop.f32.mrf.mxu0
    %1794 = vdwg.mxu0
    %v1795 = vadd.f32 %v1096, %v1787
    %v1796 = vadd.f32 %v1097, %v1792
    %v1797 = vlaneseq
    %v1798 = vshrl.u32 %v1797, 7
    %v1799 = vsub.s32 4, %v1798
    %v1800 = vrot.slane %v1099, %v1799
    %v1801 = vadd.f32 %v1795, %v1800
    %v1802 = vadd.f32 %v1796, %v1800
    %v1803 = vsel %vm162, %v1801, 0.0
    %1804 = vadd.xlane.f32.xlu0 %v1803
    %v1805 = vpop.xlane.xlu0 %1804
    %v1806 = vsel %vm162, %v1802, 0.0
    %1807 = vadd.xlane.f32.xlu0 %v1806
    %v1808 = vpop.xlane.xlu0 %1807
    %v1809 = vmul.f32 %v1805, %v169
    %v1810 = vmul.f32 %v1808, %v169
    %v1811 = vsub.f32 %v1801, %v1809
    %v1812 = vsub.f32 %v1802, %v1810
    %v1813 = vmul.f32 %v1811, %v1811
    %v1814 = vmul.f32 %v1812, %v1812
    %v1815 = vsel %vm162, %v1813, 0.0
    %1816 = vadd.xlane.f32.xlu0 %v1815
    %v1817 = vpop.xlane.xlu0 %1816
    %v1818 = vsel %vm162, %v1814, 0.0
    %1819 = vadd.xlane.f32.xlu0 %v1818
    %v1820 = vpop.xlane.xlu0 %1819
    %v1821 = vmul.f32 %v1817, %v169
    %v1822 = vmul.f32 %v1820, %v169
    %v1823 = vadd.f32 %v1821, 1e-05
    %v1824 = vadd.f32 %v1822, 1e-05
    %v1825 = vrsqrt.pop %v1823
    %v1826 = vrsqrt.pop %v1824
    %v1827 = vmul.f32 %v1811, %v1825
    %v1828 = vmul.f32 %v1812, %v1826
    %v1829 = vlaneseq
    %v1830 = vshrl.u32 %v1829, 7
    %v1831 = vsub.s32 2, %v1830
    %v1832 = vrot.slane %v1099, %v1831
    %v1833 = vmul.f32 %v1827, %v1832
    %v1834 = vmul.f32 %v1828, %v1832
    %v1835 = vlaneseq
    %v1836 = vshrl.u32 %v1835, 7
    %v1837 = vsub.s32 3, %v1836
    %v1838 = vrot.slane %v1099, %v1837
    %v1839 = vadd.f32 %v1833, %v1838
    %v1840 = vadd.f32 %v1834, %v1838
    %s1841 = scalar_lea.vmem %s7, 32
    %v1842 = vld [vmem:[%s1841] sm:$0xff]
    %v1843 = vld [vmem:[%s1841 + $0x8] sm:$0xff]
    %v1844 = vld [vmem:[%s1841 + $0x10] sm:$0xff]
    %v1845 = vld [vmem:[%s1841 + $0x18] sm:$0xff]
    %v1846 = vlaneseq
    %v1847 = vshrl.u32 %v1846, 7
    %v1848 = vsub.s32 1, %v1847
    %v1849 = vrot.slane %v1101, %v1848
    %v1851 = vsel %vm162, %v1839, 0
    %v1854 = vsel %vm162, %v1840, 0
    %1856 = vmatprep.subr.mxu0 0.0
    %1857 = vmatpush1.msra.mxu0 0.0
    %1858 = vmatprep.subr.mxu0 0.0
    %1859 = vmatpush1.msra.mxu0 0.0
    %1860 = vmatprep.subr.mxu0 0.0
    %1861 = vmatpush1.msra.mxu0 0.0
    %1862 = vmatprep.subr.mxu0 0.0
    %1863 = vmatpush1.msra.mxu0 0.0
    %1864 = vmatprep.subr.mxu0 0.0
    %1865 = vmatpush1.msra.mxu0 0.0
    %1866 = vmatprep.subr.mxu0 0.0
    %1867 = vmatpush1.msra.mxu0 0.0
    %1868 = vmatprep.subr.mxu0 0.0
    %1869 = vmatpush1.msra.mxu0 0.0
    %1870 = vmatprep.subr.mxu0 0.0
    %1871 = vmatpush1.msra.mxu0 0.0
    %1872 = vmatprep.subr.mxu0 0.0
    %1873 = vmatpush1.msra.mxu0 0.0
    %1874 = vmatprep.subr.mxu0 0.0
    %1875 = vmatpush1.msra.mxu0 0.0
    %1876 = vmatprep.subr.mxu0 0.0
    %1877 = vmatpush1.msra.mxu0 0.0
    %1878 = vmatprep.subr.mxu0 0.0
    %1879 = vmatpush1.msra.mxu0 0.0
    %1880 = vmatprep.subr.mxu0 0.0
    %1881 = vmatpush1.msra.mxu0 %v1845
    %1882 = vmatprep.subr.mxu0 0.0
    %1883 = vmatpush1.msra.mxu0 %v1844
    %1884 = vmatprep.subr.mxu0 0.0
    %1885 = vmatpush1.msra.mxu0 %v1843
    %1886 = vmatprep.subr.mxu0 0.0
    %1887 = vmatpush1.msra.mxu0 %v1842
    %1888 = vmatprep.subr.mxu0 0.0
    %1889 = vmatpush2.msra.mxu0 0.0
    %1890 = vmatprep.subr.mxu0 0.0
    %1891 = vmatpush2.msra.mxu0 0.0
    %1892 = vmatprep.subr.mxu0 0.0
    %1893 = vmatpush2.msra.mxu0 0.0
    %1894 = vmatprep.subr.mxu0 0.0
    %1895 = vmatpush2.msra.mxu0 0.0
    %1896 = vmatprep.subr.mxu0 0.0
    %1897 = vmatpush2.msra.mxu0 0.0
    %1898 = vmatprep.subr.mxu0 0.0
    %1899 = vmatpush2.msra.mxu0 0.0
    %1900 = vmatprep.subr.mxu0 0.0
    %1901 = vmatpush2.msra.mxu0 0.0
    %1902 = vmatprep.subr.mxu0 0.0
    %1903 = vmatpush2.msra.mxu0 0.0
    %1904 = vmatprep.subr.mxu0 0.0
    %1905 = vmatpush2.msra.mxu0 0.0
    %1906 = vmatprep.subr.mxu0 0.0
    %1907 = vmatpush2.msra.mxu0 0.0
    %1908 = vmatprep.subr.mxu0 0.0
    %1909 = vmatpush2.msra.mxu0 0.0
    %1910 = vmatprep.subr.mxu0 0.0
    %1911 = vmatpush2.msra.mxu0 0.0
    %1912 = vmatprep.subr.mxu0 0.0
    %1913 = vmatpush2.msra.mxu0 0.0
    %1914 = vmatprep.subr.mxu0 0.0
    %1915 = vmatpush2.msra.mxu0 0.0
    %1916 = vmatprep.subr.mxu0 0.0
    %1917 = vmatpush2.msra.mxu0 0.0
    %1918 = vmatprep.subr.mxu0 0.0
    %1919 = vmatpush2.msra.mxu0 0.0
    %1920 = vmatprep.mubr.f32.mxu0 0.0
    %1921 = vmatmul.mubr.f32.gmra.mxu0 %v1851
    %v1922 = vpop.f32.mrf.mxu0
    %v1923 = vadd.f32 %v1849, %v1922
    %v1924 = vpop.f32.mrf.mxu0
    %1925 = vmatprep.mubr.f32.mxu0 0.0
    %1926 = vmatmul.mubr.f32.gmra.mxu0 %v1854
    %v1927 = vpop.f32.mrf.mxu0
    %v1928 = vadd.f32 %v1849, %v1927
    %v1929 = vpop.f32.mrf.mxu0
    %1930 = vdwg.mxu0
    %v1931 = vmul.f32 %v1923, 0.5
    %v1932 = vmul.f32 %v1928, 0.5
    %v1933 = vmul.f32 %v1923, 0.70710677
    %v1934 = vmul.f32 %v1928, 0.70710677
    %v1935 = verf.f32.pop %v1933
    %v1936 = verf.f32.pop %v1934
    %v1937 = vadd.f32 %v1935, 1.0
    %v1938 = vadd.f32 %v1936, 1.0
    %v1939 = vmul.f32 %v1931, %v1937
    %v1940 = vmul.f32 %v1932, %v1938
    %s1941 = scalar_lea.vmem %s8, 128
    %v1942 = vld [vmem:[%s1941] sm:$0xff]
    %v1943 = vld [vmem:[%s1941 + $0x8] sm:$0xff]
    %v1944 = vld [vmem:[%s1941 + $0x10] sm:$0xff]
    %v1945 = vld [vmem:[%s1941 + $0x18] sm:$0xff]
    %v1946 = vld [vmem:[%s1941 + $0x20] sm:$0xff]
    %v1947 = vld [vmem:[%s1941 + $0x28] sm:$0xff]
    %v1948 = vld [vmem:[%s1941 + $0x30] sm:$0xff]
    %v1949 = vld [vmem:[%s1941 + $0x38] sm:$0xff]
    %v1950 = vld [vmem:[%s1941 + $0x40] sm:$0xff]
    %v1951 = vld [vmem:[%s1941 + $0x48] sm:$0xff]
    %v1952 = vld [vmem:[%s1941 + $0x50] sm:$0xff]
    %v1953 = vld [vmem:[%s1941 + $0x58] sm:$0xff]
    %v1954 = vld [vmem:[%s1941 + $0x60] sm:$0xff]
    %v1955 = vld [vmem:[%s1941 + $0x68] sm:$0xff]
    %v1956 = vld [vmem:[%s1941 + $0x70] sm:$0xff]
    %v1957 = vld [vmem:[%s1941 + $0x78] sm:$0xff]
    %v1958 = vlaneseq
    %v1959 = vshrl.u32 %v1958, 7
    %v1960 = vsub.s32 5, %v1959
    %v1961 = vrot.slane %v1099, %v1960
    %1962 = vmatprep.subr.mxu0 0.0
    %1963 = vmatpush1.msra.mxu0 %v1957
    %1964 = vmatprep.subr.mxu0 0.0
    %1965 = vmatpush1.msra.mxu0 %v1956
    %1966 = vmatprep.subr.mxu0 0.0
    %1967 = vmatpush1.msra.mxu0 %v1955
    %1968 = vmatprep.subr.mxu0 0.0
    %1969 = vmatpush1.msra.mxu0 %v1954
    %1970 = vmatprep.subr.mxu0 0.0
    %1971 = vmatpush1.msra.mxu0 %v1953
    %1972 = vmatprep.subr.mxu0 0.0
    %1973 = vmatpush1.msra.mxu0 %v1952
    %1974 = vmatprep.subr.mxu0 0.0
    %1975 = vmatpush1.msra.mxu0 %v1951
    %1976 = vmatprep.subr.mxu0 0.0
    %1977 = vmatpush1.msra.mxu0 %v1950
    %1978 = vmatprep.subr.mxu0 0.0
    %1979 = vmatpush1.msra.mxu0 %v1949
    %1980 = vmatprep.subr.mxu0 0.0
    %1981 = vmatpush1.msra.mxu0 %v1948
    %1982 = vmatprep.subr.mxu0 0.0
    %1983 = vmatpush1.msra.mxu0 %v1947
    %1984 = vmatprep.subr.mxu0 0.0
    %1985 = vmatpush1.msra.mxu0 %v1946
    %1986 = vmatprep.subr.mxu0 0.0
    %1987 = vmatpush1.msra.mxu0 %v1945
    %1988 = vmatprep.subr.mxu0 0.0
    %1989 = vmatpush1.msra.mxu0 %v1944
    %1990 = vmatprep.subr.mxu0 0.0
    %1991 = vmatpush1.msra.mxu0 %v1943
    %1992 = vmatprep.subr.mxu0 0.0
    %1993 = vmatpush1.msra.mxu0 %v1942
    %1994 = vmatprep.subr.mxu0 0.0
    %1995 = vmatpush2.msra.mxu0 0.0
    %1996 = vmatprep.subr.mxu0 0.0
    %1997 = vmatpush2.msra.mxu0 0.0
    %1998 = vmatprep.subr.mxu0 0.0
    %1999 = vmatpush2.msra.mxu0 0.0
    %2000 = vmatprep.subr.mxu0 0.0
    %2001 = vmatpush2.msra.mxu0 0.0
    %2002 = vmatprep.subr.mxu0 0.0
    %2003 = vmatpush2.msra.mxu0 0.0
    %2004 = vmatprep.subr.mxu0 0.0
    %2005 = vmatpush2.msra.mxu0 0.0
    %2006 = vmatprep.subr.mxu0 0.0
    %2007 = vmatpush2.msra.mxu0 0.0
    %2008 = vmatprep.subr.mxu0 0.0
    %2009 = vmatpush2.msra.mxu0 0.0
    %2010 = vmatprep.subr.mxu0 0.0
    %2011 = vmatpush2.msra.mxu0 0.0
    %2012 = vmatprep.subr.mxu0 0.0
    %2013 = vmatpush2.msra.mxu0 0.0
    %2014 = vmatprep.subr.mxu0 0.0
    %2015 = vmatpush2.msra.mxu0 0.0
    %2016 = vmatprep.subr.mxu0 0.0
    %2017 = vmatpush2.msra.mxu0 0.0
    %2018 = vmatprep.subr.mxu0 0.0
    %2019 = vmatpush2.msra.mxu0 0.0
    %2020 = vmatprep.subr.mxu0 0.0
    %2021 = vmatpush2.msra.mxu0 0.0
    %2022 = vmatprep.subr.mxu0 0.0
    %2023 = vmatpush2.msra.mxu0 0.0
    %2024 = vmatprep.subr.mxu0 0.0
    %2025 = vmatpush2.msra.mxu0 0.0
    %2026 = vmatprep.mubr.f32.mxu0 0.0
    %2027 = vmatmul.mubr.f32.gmra.mxu0 %v1939
    %v2028 = vpop.f32.mrf.mxu0
    %v2029 = vadd.f32 %v1961, %v2028
    %v2030 = vpop.f32.mrf.mxu0
    %2031 = vmatprep.mubr.f32.mxu0 0.0
    %2032 = vmatmul.mubr.f32.gmra.mxu0 %v1940
    %v2033 = vpop.f32.mrf.mxu0
    %v2034 = vadd.f32 %v1961, %v2033
    %v2035 = vpop.f32.mrf.mxu0
    %2036 = vdwg.mxu0
    %v2037 = vadd.f32 %v1801, %v2029
    %v2038 = vadd.f32 %v1802, %v2034
    %v2039 = vld [vmem:[%s9] sm:$0x1]
    %v2040 = vld [vmem:[%s9 + $0x1] sm:$0x1]
    %v2041 = vsel %vm162, %v2037, 0.0
    %2042 = vadd.xlane.f32.xlu0 %v2041
    %v2043 = vpop.xlane.xlu0 %2042
    %v2044 = vsel %vm162, %v2038, 0.0
    %2045 = vadd.xlane.f32.xlu0 %v2044
    %v2046 = vpop.xlane.xlu0 %2045
    %v2047 = vmul.f32 %v2043, %v169
    %v2048 = vmul.f32 %v2046, %v169
    %v2049 = vsub.f32 %v2037, %v2047
    %v2050 = vsub.f32 %v2038, %v2048
    %v2051 = vmul.f32 %v2049, %v2049
    %v2052 = vmul.f32 %v2050, %v2050
    %v2053 = vsel %vm162, %v2051, 0.0
    %2054 = vadd.xlane.f32.xlu0 %v2053
    %v2055 = vpop.xlane.xlu0 %2054
    %v2056 = vsel %vm162, %v2052, 0.0
    %2057 = vadd.xlane.f32.xlu0 %v2056
    %v2058 = vpop.xlane.xlu0 %2057
    %v2059 = vmul.f32 %v2055, %v169
    %v2060 = vmul.f32 %v2058, %v169
    %v2061 = vadd.f32 %v2059, 1e-05
    %v2062 = vadd.f32 %v2060, 1e-05
    %v2063 = vrsqrt.pop %v2061
    %v2064 = vrsqrt.pop %v2062
    %v2065 = vmul.f32 %v2049, %v2063
    %v2066 = vmul.f32 %v2050, %v2064
    %v2067 = vlaneseq
    %v2068 = vshrl.u32 %v2067, 7
    %v2069 = vsub.s32 0, %v2068
    %v2070 = vrot.slane %v2039, %v2069
    %v2071 = vmul.f32 %v2065, %v2070
    %v2072 = vmul.f32 %v2066, %v2070
    %v2073 = vlaneseq
    %v2074 = vshrl.u32 %v2073, 7
    %v2075 = vsub.s32 0, %v2074
    %v2076 = vrot.slane %v2040, %v2075
    %v2077 = vadd.f32 %v2071, %v2076
    %v2078 = vadd.f32 %v2072, %v2076
    %v2079 = vld [vmem:[%s10] sm:$0xff]
    %v2080 = vld [vmem:[%s10 + $0x8] sm:$0xff]
    %v2081 = vld [vmem:[%s10 + $0x10] sm:$0xff]
    %v2082 = vld [vmem:[%s10 + $0x18] sm:$0xff]
    %v2084 = vsel %vm162, %v2077, 0
    %v2087 = vsel %vm162, %v2078, 0
    %2089 = vmatprep.subr.mxu0 0.0
    %2090 = vmatpush1.msra.mxu0 0.0
    %2091 = vmatprep.subr.mxu0 0.0
    %2092 = vmatpush1.msra.mxu0 0.0
    %2093 = vmatprep.subr.mxu0 0.0
    %2094 = vmatpush1.msra.mxu0 0.0
    %2095 = vmatprep.subr.mxu0 0.0
    %2096 = vmatpush1.msra.mxu0 0.0
    %2097 = vmatprep.subr.mxu0 0.0
    %2098 = vmatpush1.msra.mxu0 0.0
    %2099 = vmatprep.subr.mxu0 0.0
    %2100 = vmatpush1.msra.mxu0 0.0
    %2101 = vmatprep.subr.mxu0 0.0
    %2102 = vmatpush1.msra.mxu0 0.0
    %2103 = vmatprep.subr.mxu0 0.0
    %2104 = vmatpush1.msra.mxu0 0.0
    %2105 = vmatprep.subr.mxu0 0.0
    %2106 = vmatpush1.msra.mxu0 0.0
    %2107 = vmatprep.subr.mxu0 0.0
    %2108 = vmatpush1.msra.mxu0 0.0
    %2109 = vmatprep.subr.mxu0 0.0
    %2110 = vmatpush1.msra.mxu0 0.0
    %2111 = vmatprep.subr.mxu0 0.0
    %2112 = vmatpush1.msra.mxu0 0.0
    %2113 = vmatprep.subr.mxu0 0.0
    %2114 = vmatpush1.msra.mxu0 %v2082
    %2115 = vmatprep.subr.mxu0 0.0
    %2116 = vmatpush1.msra.mxu0 %v2081
    %2117 = vmatprep.subr.mxu0 0.0
    %2118 = vmatpush1.msra.mxu0 %v2080
    %2119 = vmatprep.subr.mxu0 0.0
    %2120 = vmatpush1.msra.mxu0 %v2079
    %2121 = vmatprep.subr.mxu0 0.0
    %2122 = vmatpush2.msra.mxu0 0.0
    %2123 = vmatprep.subr.mxu0 0.0
    %2124 = vmatpush2.msra.mxu0 0.0
    %2125 = vmatprep.subr.mxu0 0.0
    %2126 = vmatpush2.msra.mxu0 0.0
    %2127 = vmatprep.subr.mxu0 0.0
    %2128 = vmatpush2.msra.mxu0 0.0
    %2129 = vmatprep.subr.mxu0 0.0
    %2130 = vmatpush2.msra.mxu0 0.0
    %2131 = vmatprep.subr.mxu0 0.0
    %2132 = vmatpush2.msra.mxu0 0.0
    %2133 = vmatprep.subr.mxu0 0.0
    %2134 = vmatpush2.msra.mxu0 0.0
    %2135 = vmatprep.subr.mxu0 0.0
    %2136 = vmatpush2.msra.mxu0 0.0
    %2137 = vmatprep.subr.mxu0 0.0
    %2138 = vmatpush2.msra.mxu0 0.0
    %2139 = vmatprep.subr.mxu0 0.0
    %2140 = vmatpush2.msra.mxu0 0.0
    %2141 = vmatprep.subr.mxu0 0.0
    %2142 = vmatpush2.msra.mxu0 0.0
    %2143 = vmatprep.subr.mxu0 0.0
    %2144 = vmatpush2.msra.mxu0 0.0
    %2145 = vmatprep.subr.mxu0 0.0
    %2146 = vmatpush2.msra.mxu0 0.0
    %2147 = vmatprep.subr.mxu0 0.0
    %2148 = vmatpush2.msra.mxu0 0.0
    %2149 = vmatprep.subr.mxu0 0.0
    %2150 = vmatpush2.msra.mxu0 0.0
    %2151 = vmatprep.subr.mxu0 0.0
    %2152 = vmatpush2.msra.mxu0 0.0
    %2153 = vmatprep.mubr.f32.mxu0 0.0
    %2154 = vmatmul.mubr.f32.gmra.mxu0 %v2084
    %v2155 = vpop.f32.mrf.mxu0
    %v2156 = vadd.f32 0.0, %v2155
    %v2157 = vpop.f32.mrf.mxu0
    %2158 = vmatprep.mubr.f32.mxu0 0.0
    %2159 = vmatmul.mubr.f32.gmra.mxu0 %v2087
    %v2160 = vpop.f32.mrf.mxu0
    %v2161 = vadd.f32 0.0, %v2160
    %v2162 = vpop.f32.mrf.mxu0
    %2163 = vdwg.mxu0
    %2164 = vst [vmem:[#allocation2] sm:$0xff] %v2156
    %2165 = vst [vmem:[#allocation2 + $0x8] sm:$0xff] %v2161
    // Predicated region
    $region46: #{_lambda_.1} parent=1 // pred_check
      _
    $region47: #{_lambda_.1} parent=1 // pred_check_branch
      %2167 = sbr.rel (0) target = $region49
    $region48: #{_lambda_.1} parent=1 // pred_region
      %s2169 = ssub.s32 256, 256
      %2170 = vsyncadd [#allocation3], %s2169
      %s2171 = sshll.u32 [#allocation2], 4
      %s2172 = int_to_ptr.vmem [resolvable:$true] %s2171
      %2177 = dma.vmem_to_hbm [thread:$0]  %s2172, 256, %s11, [#allocation3], 128, 128, 8
    $region49: #{_lambda_.1} parent=1 // pred_fallthru
      _
    // Predicated region
    $region50: #{_lambda_.1} parent=1 // pred_check
      _
    $region51: #{_lambda_.1} parent=1 // pred_check_branch
      %2179 = sbr.rel (0) target = $region53
    $region52: #{_lambda_.1} parent=1 // pred_region
      %2180 = dma.done [#allocation3], 256
    $region53: #{_lambda_.1} parent=1 // pred_fallthru
      _
    %2181 = vsyncpa [#allocation3], 1

</llo_original>
